<compile_context>
chip_gen: v7x
topology: tpu7x:2x2x1
jax: 0.10.0
libtpu: 0.0.40
codegen_flags: <defaults>
</compile_context>

<pallas_src>
import functools
import math

import jax
import jax.numpy as jnp
from jax import lax
from jax.experimental import pallas as pl
from jax.experimental.pallas import tpu as pltpu


# ----------------------------------------------------------------------------
# Tiling helpers.
# ----------------------------------------------------------------------------
def _tile_and_pad(n):
    """Pick a lane-aligned point tile (<= 1024) and the padded N it divides."""
    n128 = pl.cdiv(n, 128) * 128
    for t in (1024, 512, 256, 128):
        if n128 % t == 0:
            return t, n128
    return 128, n128   # unreachable: n128 is a multiple of 128


def _pad_last(x, n_pad):
    n = x.shape[-1]
    if n == n_pad:
        return x
    cfg = [(0, 0)] * (x.ndim - 1) + [(0, n_pad - n)]
    return jnp.pad(x, cfg)


# ----------------------------------------------------------------------------
# Pallas kernel 1: fully fused LMFEAM pointwise-MLP stack, (C_out, N) layout.
# ----------------------------------------------------------------------------
def _lmfeam_fused_kernel(x_ref,
                         w11, b11, w12, b12,
                         wm1, bm1, wm2, bm2,
                         w21a, w21b, b21, w22, b22,
                         wh1, bh1, wh2, bh2, wh3, bh3,
                         feat_ref, msf_ref):
    def mm(w_ref, a_bf):
        # (cout, cin) @ (cin, tn): points on MXU output lanes, f32 accumulation.
        return lax.dot_general(w_ref[...], a_bf, (((1,), (0,)), ((), ())),
                               preferred_element_type=jnp.float32)

    def layer(w_ref, b_ref, a_bf):
        return jnp.maximum(mm(w_ref, a_bf) + b_ref[...], 0.0)

    x = x_ref[0]                                               # (Cpad, tn) bf16
    h = layer(w11, b11, x).astype(jnp.bfloat16)                # (32, tn)
    h1 = layer(w12, b12, h).astype(jnp.bfloat16)               # (64, tn)

    # Three mfem branches batched into one wide matmul (point_scale folded into
    # wm1; second layer is the exact block-diagonal equivalent) -> msf comes
    # out pre-concatenated.
    hm = layer(wm1, bm1, h1).astype(jnp.bfloat16)              # (192, tn)
    msf = layer(wm2, bm2, hm)                                  # (18, tn) f32
    msf_bf = msf.astype(jnp.bfloat16)

    # mlp2 first layer on concat([h1, msf]) realised as two weight blocks.
    h2 = jnp.maximum(mm(w21a, h1) + mm(w21b, msf_bf) + b21[...], 0.0)
    h2 = h2.astype(jnp.bfloat16)                               # (128, tn)
    h2 = layer(w22, b22, h2).astype(jnp.bfloat16)              # (128, tn)

    f = layer(wh1, bh1, h2).astype(jnp.bfloat16)               # (128, tn)
    f = layer(wh2, bh2, f).astype(jnp.bfloat16)                # (64, tn)
    feat = mm(wh3, f) + bh3[...]                               # (fd, tn), no ReLU

    feat_ref[0] = feat.astype(feat_ref.dtype)                  # lane-dense store
    msf_ref[0] = msf.astype(msf_ref.dtype)                     # lane-dense store


def lmfeam_forward(x, params, feature_dim, msf_dim):
    """x: (B, C, N) -> feature (B, fd, N_pad) bf16, msf (B, msf_dim, N_pad) f32.

    N_pad is N rounded up to the point-tile (multiple of 128); callers slice.
    """
    B, C, N = x.shape
    tile_n, n_pad = _tile_and_pad(N)
    c_pad = params[0].shape[1]          # w11 is (32, c_pad)

    x = _pad_last(x.astype(jnp.bfloat16), n_pad)
    if C < c_pad:
        x = jnp.pad(x, ((0, 0), (0, c_pad - C), (0, 0)))

    grid = (B, n_pad // tile_n)
    in_specs = [pl.BlockSpec((1, c_pad, tile_n), lambda b, n: (b, 0, n))]
    in_specs += [pl.BlockSpec(p.shape, lambda b, n: (0, 0)) for p in params]
    out_specs = (
        pl.BlockSpec((1, feature_dim, tile_n), lambda b, n: (b, 0, n)),
        pl.BlockSpec((1, msf_dim, tile_n), lambda b, n: (b, 0, n)),
    )
    feat, msf = pl.pallas_call(
        _lmfeam_fused_kernel,
        out_shape=(jax.ShapeDtypeStruct((B, feature_dim, n_pad), jnp.bfloat16),
                   jax.ShapeDtypeStruct((B, msf_dim, n_pad), jnp.float32)),
        grid=grid,
        in_specs=in_specs,
        out_specs=out_specs,
        compiler_params=pltpu.CompilerParams(
            dimension_semantics=("parallel", "parallel")),
    )(x, *params)
    return feat, msf


# ----------------------------------------------------------------------------
# Pallas kernels 2a/2b: soft-SLIC (SSN) soft k-means, N-tiled, (K, N) layout.
# ----------------------------------------------------------------------------
def _slic_iter_kernel(f_ref, c0_ref, c_ref, cent_sc, num_sc, den_sc, *,
                      n_valid, n_total, tile_n):
    it = pl.program_id(1)
    nt = pl.program_id(2)
    last_it = pl.num_programs(1) - 1
    last_nt = pl.num_programs(2) - 1

    @pl.when(jnp.logical_and(it == 0, nt == 0))
    def _():
        cent_sc[...] = c0_ref[0].astype(jnp.float32)        # (K, D)
        num_sc[...] = jnp.zeros_like(num_sc)
        den_sc[...] = jnp.zeros_like(den_sc)

    f_dn = f_ref[0]                                         # (D, tile) bf16
    c = cent_sc[...]                                        # (K, D) f32
    csq = jnp.sum(c * c, axis=1, keepdims=True)             # (K, 1)
    # -||f - c||^2 up to a per-point constant: 2 c.f - |c|^2 (softmax-invariant).
    logits = 2.0 * lax.dot_general(c.astype(jnp.bfloat16), f_dn,
                                   (((1,), (0,)), ((), ())),
                                   preferred_element_type=jnp.float32) - csq
    m = jnp.max(logits, axis=0, keepdims=True)              # (1, tile)
    e = jnp.exp(logits - m)                                 # lane-dense (K, tile)
    q = e * (1.0 / jnp.sum(e, axis=0, keepdims=True))       # exact normalisation

    if n_valid < n_total:
        # Zero the contribution of N-padding columns to the centre update.
        col = nt * tile_n + lax.broadcasted_iota(jnp.int32, (1, tile_n), 1)
        q = jnp.where(col < n_valid, q, 0.0)

    num_sc[...] += lax.dot_general(q.astype(jnp.bfloat16), f_dn,
                                   (((1,), (1,)), ((), ())),
                                   preferred_element_type=jnp.float32)   # (K, D)
    den_sc[...] += jnp.sum(q, axis=1, keepdims=True)                     # (K, 1)

    @pl.when(nt == last_nt)
    def _():
        cent_sc[...] = num_sc[...] / (den_sc[...] + 1e-8)   # exact division
        num_sc[...] = jnp.zeros_like(num_sc)
        den_sc[...] = jnp.zeros_like(den_sc)

    @pl.when(jnp.logical_and(it == last_it, nt == last_nt))
    def _():
        c_ref[0] = cent_sc[...].astype(c_ref.dtype)         # once per batch


def _slic_assign_kernel(f_ref, c_ref, q_ref, lab_ref):
    f_dn = f_ref[0]                                         # (D, tile) bf16
    c = c_ref[0]                                            # (K, D) f32
    K = c.shape[0]
    csq = jnp.sum(c * c, axis=1, keepdims=True)
    logits = 2.0 * lax.dot_general(c.astype(jnp.bfloat16), f_dn,
                                   (((1,), (0,)), ((), ())),
                                   preferred_element_type=jnp.float32) - csq
    m = jnp.max(logits, axis=0, keepdims=True)
    e = jnp.exp(logits - m)
    q = e * (1.0 / jnp.sum(e, axis=0, keepdims=True))       # (K, tile)

    # Hard labels: first-argmax over K (same argmax as q).
    idx = lax.broadcasted_iota(jnp.int32, logits.shape, 0)
    labels = jnp.min(jnp.where(logits == m, idx, K), axis=0, keepdims=True)

    q_ref[0] = q.astype(q_ref.dtype)                        # (K, tile)
    lab_ref[0] = labels.astype(lab_ref.dtype)               # (1, tile)


def soft_slic_pknn(feature, init_centers, n_iter, n_valid=None):
    """feature: (B, D, N), init_centers: (B, D, K) (PyTorch layout).

    Returns (soft_assignment (B, K, n_valid), hard_labels (B, n_valid),
             centers (B, D, K)).
    # TODO(synk): the real pknn backend restricts each point to its k nearest
    # superpixel candidates; here the soft assignment is dense over all K.
    # TODO(synk): when B == 1 the iteration kernel runs on a single TensorCore
    # on v7x; per-core partial (K, D)/(K, 1) accumulation plus a combine pass
    # would recover the second core.
    """
    B, D, N_in = feature.shape
    K = init_centers.shape[2]
    if n_valid is None:
        n_valid = N_in
    tile_n, n_pad = _tile_and_pad(N_in)
    feature = _pad_last(feature.astype(jnp.bfloat16), n_pad)
    init_kd = jnp.swapaxes(init_centers, 1, 2).astype(jnp.bfloat16)   # (B, K, D)
    num_tiles = n_pad // tile_n

    if n_iter > 0:
        centers_kd = pl.pallas_call(
            functools.partial(_slic_iter_kernel, n_valid=n_valid,
                              n_total=n_pad, tile_n=tile_n),
            out_shape=jax.ShapeDtypeStruct((B, K, D), jnp.float32),
            grid=(B, n_iter, num_tiles),
            in_specs=[pl.BlockSpec((1, D, tile_n), lambda b, i, t: (b, 0, t)),
                      pl.BlockSpec((1, K, D), lambda b, i, t: (b, 0, 0))],
            out_specs=pl.BlockSpec((1, K, D), lambda b, i, t: (b, 0, 0)),
            scratch_shapes=[pltpu.VMEM((K, D), jnp.float32),
                            pltpu.VMEM((K, D), jnp.float32),
                            pltpu.VMEM((K, 1), jnp.float32)],
            compiler_params=pltpu.CompilerParams(
                dimension_semantics=("parallel", "arbitrary", "arbitrary")),
        )(feature, init_kd)
    else:
        centers_kd = init_kd.astype(jnp.float32)

    q, labels = pl.pallas_call(
        _slic_assign_kernel,
        out_shape=(jax.ShapeDtypeStruct((B, K, n_pad), jnp.float32),
                   jax.ShapeDtypeStruct((B, 1, n_pad), jnp.int32)),
        grid=(B, num_tiles),
        in_specs=[pl.BlockSpec((1, D, tile_n), lambda b, t: (b, 0, t)),
                  pl.BlockSpec((1, K, D), lambda b, t: (b, 0, 0))],
        out_specs=(pl.BlockSpec((1, K, tile_n), lambda b, t: (b, 0, t)),
                   pl.BlockSpec((1, 1, tile_n), lambda b, t: (b, 0, t))),
        compiler_params=pltpu.CompilerParams(
            dimension_semantics=("parallel", "parallel")),
    )(feature, centers_kd)

    return (q[:, :, :n_valid], labels[:, 0, :n_valid],
            jnp.swapaxes(centers_kd, 1, 2))


# ----------------------------------------------------------------------------
# LMFEAM_SSN module (deterministic synthetic parameters).
# ----------------------------------------------------------------------------
class LMFEAM_SSN:
    def __init__(self, feature_dim, nspix, mfem_dim=6, n_iter=10,
                 RGB=False, normal=False, seed=0):
        self.nspix = nspix
        self.n_iter = n_iter
        self.channel = 3 + (3 if RGB else 0) + (3 if normal else 0)
        self.point_scale = (0.2, 0.4, 0.6)
        self.mfem_dim = mfem_dim
        self.feature_dim = feature_dim
        self.msf_dim = mfem_dim * len(self.point_scale)

        keys = iter(jax.random.split(jax.random.PRNGKey(seed), 64))

        def lin(cin, cout):
            kw, kb = jax.random.split(next(keys))
            w = jax.random.normal(kw, (cout, cin), jnp.float32) / math.sqrt(cin)
            b = 0.01 * jax.random.normal(kb, (cout,), jnp.float32)
            return w, b

        # TODO(synk): LMFEAM source (knn/ball-query grouping with k=32) is not
        # in the provided file; reconstructed as multi-scale pointwise MLPs
        # matching the constructor's layer widths.  BatchNorm folded to identity.
        c_pad = pl.cdiv(self.channel, 8) * 8      # sublane-align first layer
        w11, b11 = lin(self.channel, 32)
        w11 = jnp.pad(w11, ((0, 0), (0, c_pad - self.channel)))
        w12, b12 = lin(32, 64)

        branches = [(lin(64, 64), lin(64, mfem_dim)) for _ in self.point_scale]
        # Fold point_scale into the first branch weights and stack the three
        # branches into one 192x64 matmul; the second layer is the exact
        # block-diagonal equivalent (18 x 192), so msf comes out pre-concat.
        wm1 = jnp.concatenate(
            [jnp.float32(s) * wA
             for s, ((wA, _), _) in zip(self.point_scale, branches)], axis=0)
        bm1 = jnp.concatenate([bA for ((_, bA), _) in branches], axis=0)
        wm2 = jnp.zeros((self.msf_dim, 64 * len(self.point_scale)), jnp.float32)
        bm2_parts = []
        for i, (_, (wB, bB)) in enumerate(branches):
            wm2 = wm2.at[mfem_dim * i:mfem_dim * (i + 1),
                         64 * i:64 * (i + 1)].set(wB)
            bm2_parts.append(bB)
        bm2 = jnp.concatenate(bm2_parts, axis=0)

        w21, b21 = lin(64 + self.msf_dim, 128)    # split: no channel concat needed
        w21a, w21b = w21[:, :64], w21[:, 64:]
        w22, b22 = lin(128, 128)
        wh1, bh1 = lin(128, 128)
        wh2, bh2 = lin(128, 64)
        wh3, bh3 = lin(64, feature_dim)

        def W(w):
            return w.astype(jnp.bfloat16)

        def Bv(b):
            return b.reshape(-1, 1).astype(jnp.float32)

        self.params = (
            W(w11), Bv(b11), W(w12), Bv(b12),
            W(wm1), Bv(bm1), W(wm2), Bv(bm2),
            W(w21a), W(w21b), Bv(b21), W(w22), Bv(b22),
            W(wh1), Bv(bh1), W(wh2), Bv(bh2), W(wh3), Bv(bh3),
        )

    def lmfeam(self, x):
        # x: (B, C, N) -> feature (B, feature_dim, N_pad) bf16,
        #                 msf (B, 3*mfem_dim, N_pad) f32   (N_pad >= N, aligned)
        return lmfeam_forward(x, self.params, self.feature_dim, self.msf_dim)

    def __call__(self, x):
        N = x.shape[2]
        feature, msf = self.lmfeam(x)
        init_centers = feature[:, :, :self.nspix]
        ssn = soft_slic_pknn(feature, init_centers, self.n_iter, n_valid=N)
        return ssn, msf[:, :, :N]


# ----------------------------------------------------------------------------
if __name__ == "__main__":
    B, C, N = 2, 3, 128          # small point cloud: batch=2, xyz, 128 points
    feature_dim, nspix = 16, 32

    key = jax.random.PRNGKey(0)
    x = jax.random.normal(key, (B, C, N), jnp.float32)

    model = LMFEAM_SSN(feature_dim=feature_dim, nspix=nspix,
                       mfem_dim=6, n_iter=10)
    (soft_assign, hard_labels, centers), msf = model(x)

    jax.block_until_ready((soft_assign, hard_labels, centers, msf))
    assert soft_assign.shape == (B, nspix, N)
    assert hard_labels.shape == (B, N)
    assert centers.shape == (B, feature_dim, nspix)
    assert msf.shape == (B, 18, N)
    assert bool(jnp.isfinite(soft_assign).all())
    assert bool(jnp.allclose(jnp.sum(soft_assign, axis=1), 1.0, atol=1e-3))
    assert bool((hard_labels >= 0).all()) and bool((hard_labels < nspix).all())
    print("KERNEL_OK")
</pallas_src>

<mosaic_0001>
module attributes {stable_mosaic.version = 11 : i64} {
  func.func @_lmfeam_fused_kernel(%arg0: i32, %arg1: i32, %arg2: memref<1x8x128xbf16, #tpu.memory_space<vmem>>, %arg3: memref<32x8xbf16, #tpu.memory_space<vmem>>, %arg4: memref<32x1xf32, #tpu.memory_space<vmem>>, %arg5: memref<64x32xbf16, #tpu.memory_space<vmem>>, %arg6: memref<64x1xf32, #tpu.memory_space<vmem>>, %arg7: memref<192x64xbf16, #tpu.memory_space<vmem>>, %arg8: memref<192x1xf32, #tpu.memory_space<vmem>>, %arg9: memref<18x192xbf16, #tpu.memory_space<vmem>>, %arg10: memref<18x1xf32, #tpu.memory_space<vmem>>, %arg11: memref<128x64xbf16, #tpu.memory_space<vmem>>, %arg12: memref<128x18xbf16, #tpu.memory_space<vmem>>, %arg13: memref<128x1xf32, #tpu.memory_space<vmem>>, %arg14: memref<128x128xbf16, #tpu.memory_space<vmem>>, %arg15: memref<128x1xf32, #tpu.memory_space<vmem>>, %arg16: memref<128x128xbf16, #tpu.memory_space<vmem>>, %arg17: memref<128x1xf32, #tpu.memory_space<vmem>>, %arg18: memref<64x128xbf16, #tpu.memory_space<vmem>>, %arg19: memref<64x1xf32, #tpu.memory_space<vmem>>, %arg20: memref<16x64xbf16, #tpu.memory_space<vmem>>, %arg21: memref<16x1xf32, #tpu.memory_space<vmem>>, %arg22: memref<1x16x128xbf16, #tpu.memory_space<vmem>>, %arg23: memref<1x18x128xf32, #tpu.memory_space<vmem>>) attributes {dimension_semantics = [#tpu.dimension_semantics<parallel>, #tpu.dimension_semantics<parallel>], iteration_bounds = array<i64: 2, 1>, scalar_prefetch = 0 : i64, scratch_operands = 0 : i64, tpu.core_type = #tpu.core_type<tc>, window_params = [{transform_indices = @transform_0, window_bounds = array<i64: 1, 8, 128>}, {pipeline_mode = #tpu.pipeline_mode<synchronous>, transform_indices = @transform_1, window_bounds = array<i64: 32, 8>}, {pipeline_mode = #tpu.pipeline_mode<synchronous>, transform_indices = @transform_2, window_bounds = array<i64: 32, 1>}, {pipeline_mode = #tpu.pipeline_mode<synchronous>, transform_indices = @transform_3, window_bounds = array<i64: 64, 32>}, {pipeline_mode = #tpu.pipeline_mode<synchronous>, transform_indices = @transform_4, window_bounds = array<i64: 64, 1>}, {pipeline_mode = #tpu.pipeline_mode<synchronous>, transform_indices = @transform_5, window_bounds = array<i64: 192, 64>}, {pipeline_mode = #tpu.pipeline_mode<synchronous>, transform_indices = @transform_6, window_bounds = array<i64: 192, 1>}, {pipeline_mode = #tpu.pipeline_mode<synchronous>, transform_indices = @transform_7, window_bounds = array<i64: 18, 192>}, {pipeline_mode = #tpu.pipeline_mode<synchronous>, transform_indices = @transform_8, window_bounds = array<i64: 18, 1>}, {pipeline_mode = #tpu.pipeline_mode<synchronous>, transform_indices = @transform_9, window_bounds = array<i64: 128, 64>}, {pipeline_mode = #tpu.pipeline_mode<synchronous>, transform_indices = @transform_10, window_bounds = array<i64: 128, 18>}, {pipeline_mode = #tpu.pipeline_mode<synchronous>, transform_indices = @transform_11, window_bounds = array<i64: 128, 1>}, {pipeline_mode = #tpu.pipeline_mode<synchronous>, transform_indices = @transform_12, window_bounds = array<i64: 128, 128>}, {pipeline_mode = #tpu.pipeline_mode<synchronous>, transform_indices = @transform_13, window_bounds = array<i64: 128, 1>}, {pipeline_mode = #tpu.pipeline_mode<synchronous>, transform_indices = @transform_14, window_bounds = array<i64: 128, 128>}, {pipeline_mode = #tpu.pipeline_mode<synchronous>, transform_indices = @transform_15, window_bounds = array<i64: 128, 1>}, {pipeline_mode = #tpu.pipeline_mode<synchronous>, transform_indices = @transform_16, window_bounds = array<i64: 64, 128>}, {pipeline_mode = #tpu.pipeline_mode<synchronous>, transform_indices = @transform_17, window_bounds = array<i64: 64, 1>}, {pipeline_mode = #tpu.pipeline_mode<synchronous>, transform_indices = @transform_18, window_bounds = array<i64: 16, 64>}, {pipeline_mode = #tpu.pipeline_mode<synchronous>, transform_indices = @transform_19, window_bounds = array<i64: 16, 1>}, {transform_indices = @transform_20, window_bounds = array<i64: 1, 16, 128>}, {transform_indices = @transform_21, window_bounds = array<i64: 1, 18, 128>}]} {
    %c0 = arith.constant 0 : index
    %c0_0 = arith.constant 0 : index
    %c0_1 = arith.constant 0 : index
    %0 = vector.load %arg2[%c0, %c0_0, %c0_1] : memref<1x8x128xbf16, #tpu.memory_space<vmem>>, vector<1x8x128xbf16>
    %1 = vector.shape_cast %0 : vector<1x8x128xbf16> to vector<8x128xbf16>
    %c0_2 = arith.constant 0 : index
    %c0_3 = arith.constant 0 : index
    %2 = vector.load %arg3[%c0_2, %c0_3] : memref<32x8xbf16, #tpu.memory_space<vmem>>, vector<32x8xbf16>
    %cst = arith.constant dense<0.000000e+00> : vector<32x128xf32>
    %3 = tpu.matmul %2, %1, %cst {dimension_numbers = #tpu.dot_dimension_numbers<[1], [0], [0], [1], [0, 0, 1, 1], [], []>} : vector<32x8xbf16>, vector<8x128xbf16>, vector<32x128xf32> -> vector<32x128xf32>
    %c0_4 = arith.constant 0 : index
    %c0_5 = arith.constant 0 : index
    %4 = vector.load %arg4[%c0_4, %c0_5] : memref<32x1xf32, #tpu.memory_space<vmem>>, vector<32x1xf32>
    %5 = vector.broadcast %4 : vector<32x1xf32> to vector<32x128xf32>
    %6 = arith.addf %3, %5 : vector<32x128xf32>
    %cst_6 = arith.constant 0.000000e+00 : f32
    %7 = vector.broadcast %cst_6 : f32 to vector<32x128xf32>
    %8 = arith.maximumf %6, %7 : vector<32x128xf32>
    %9 = arith.truncf %8 : vector<32x128xf32> to vector<32x128xbf16>
    %c0_7 = arith.constant 0 : index
    %c0_8 = arith.constant 0 : index
    %10 = vector.load %arg5[%c0_7, %c0_8] : memref<64x32xbf16, #tpu.memory_space<vmem>>, vector<64x32xbf16>
    %cst_9 = arith.constant dense<0.000000e+00> : vector<64x128xf32>
    %11 = tpu.matmul %10, %9, %cst_9 {dimension_numbers = #tpu.dot_dimension_numbers<[1], [0], [0], [1], [0, 0, 1, 1], [], []>} : vector<64x32xbf16>, vector<32x128xbf16>, vector<64x128xf32> -> vector<64x128xf32>
    %c0_10 = arith.constant 0 : index
    %c0_11 = arith.constant 0 : index
    %12 = vector.load %arg6[%c0_10, %c0_11] : memref<64x1xf32, #tpu.memory_space<vmem>>, vector<64x1xf32>
    %13 = vector.broadcast %12 : vector<64x1xf32> to vector<64x128xf32>
    %14 = arith.addf %11, %13 : vector<64x128xf32>
    %cst_12 = arith.constant 0.000000e+00 : f32
    %15 = vector.broadcast %cst_12 : f32 to vector<64x128xf32>
    %16 = arith.maximumf %14, %15 : vector<64x128xf32>
    %17 = arith.truncf %16 : vector<64x128xf32> to vector<64x128xbf16>
    %c0_13 = arith.constant 0 : index
    %c0_14 = arith.constant 0 : index
    %18 = vector.load %arg7[%c0_13, %c0_14] : memref<192x64xbf16, #tpu.memory_space<vmem>>, vector<192x64xbf16>
    %cst_15 = arith.constant dense<0.000000e+00> : vector<192x128xf32>
    %19 = tpu.matmul %18, %17, %cst_15 {dimension_numbers = #tpu.dot_dimension_numbers<[1], [0], [0], [1], [0, 0, 1, 1], [], []>} : vector<192x64xbf16>, vector<64x128xbf16>, vector<192x128xf32> -> vector<192x128xf32>
    %c0_16 = arith.constant 0 : index
    %c0_17 = arith.constant 0 : index
    %20 = vector.load %arg8[%c0_16, %c0_17] : memref<192x1xf32, #tpu.memory_space<vmem>>, vector<192x1xf32>
    %21 = vector.broadcast %20 : vector<192x1xf32> to vector<192x128xf32>
    %22 = arith.addf %19, %21 : vector<192x128xf32>
    %cst_18 = arith.constant 0.000000e+00 : f32
    %23 = vector.broadcast %cst_18 : f32 to vector<192x128xf32>
    %24 = arith.maximumf %22, %23 : vector<192x128xf32>
    %25 = arith.truncf %24 : vector<192x128xf32> to vector<192x128xbf16>
    %c0_19 = arith.constant 0 : index
    %c0_20 = arith.constant 0 : index
    %26 = vector.load %arg9[%c0_19, %c0_20] : memref<18x192xbf16, #tpu.memory_space<vmem>>, vector<18x192xbf16>
    %cst_21 = arith.constant dense<0.000000e+00> : vector<18x128xf32>
    %27 = tpu.matmul %26, %25, %cst_21 {dimension_numbers = #tpu.dot_dimension_numbers<[1], [0], [0], [1], [0, 0, 1, 1], [], []>} : vector<18x192xbf16>, vector<192x128xbf16>, vector<18x128xf32> -> vector<18x128xf32>
    %c0_22 = arith.constant 0 : index
    %c0_23 = arith.constant 0 : index
    %28 = vector.load %arg10[%c0_22, %c0_23] : memref<18x1xf32, #tpu.memory_space<vmem>>, vector<18x1xf32>
    %29 = vector.broadcast %28 : vector<18x1xf32> to vector<18x128xf32>
    %30 = arith.addf %27, %29 : vector<18x128xf32>
    %cst_24 = arith.constant 0.000000e+00 : f32
    %31 = vector.broadcast %cst_24 : f32 to vector<18x128xf32>
    %32 = arith.maximumf %30, %31 : vector<18x128xf32>
    %33 = arith.truncf %32 : vector<18x128xf32> to vector<18x128xbf16>
    %c0_25 = arith.constant 0 : index
    %c0_26 = arith.constant 0 : index
    %34 = vector.load %arg11[%c0_25, %c0_26] : memref<128x64xbf16, #tpu.memory_space<vmem>>, vector<128x64xbf16>
    %cst_27 = arith.constant dense<0.000000e+00> : vector<128x128xf32>
    %35 = tpu.matmul %34, %17, %cst_27 {dimension_numbers = #tpu.dot_dimension_numbers<[1], [0], [0], [1], [0, 0, 1, 1], [], []>} : vector<128x64xbf16>, vector<64x128xbf16>, vector<128x128xf32> -> vector<128x128xf32>
    %c0_28 = arith.constant 0 : index
    %c0_29 = arith.constant 0 : index
    %36 = vector.load %arg12[%c0_28, %c0_29] : memref<128x18xbf16, #tpu.memory_space<vmem>>, vector<128x18xbf16>
    %cst_30 = arith.constant dense<0.000000e+00> : vector<128x128xf32>
    %37 = tpu.matmul %36, %33, %cst_30 {dimension_numbers = #tpu.dot_dimension_numbers<[1], [0], [0], [1], [0, 0, 1, 1], [], []>} : vector<128x18xbf16>, vector<18x128xbf16>, vector<128x128xf32> -> vector<128x128xf32>
    %38 = arith.addf %35, %37 : vector<128x128xf32>
    %c0_31 = arith.constant 0 : index
    %c0_32 = arith.constant 0 : index
    %39 = vector.load %arg13[%c0_31, %c0_32] : memref<128x1xf32, #tpu.memory_space<vmem>>, vector<128x1xf32>
    %40 = vector.broadcast %39 : vector<128x1xf32> to vector<128x128xf32>
    %41 = arith.addf %38, %40 : vector<128x128xf32>
    %cst_33 = arith.constant 0.000000e+00 : f32
    %42 = vector.broadcast %cst_33 : f32 to vector<128x128xf32>
    %43 = arith.maximumf %41, %42 : vector<128x128xf32>
    %44 = arith.truncf %43 : vector<128x128xf32> to vector<128x128xbf16>
    %c0_34 = arith.constant 0 : index
    %c0_35 = arith.constant 0 : index
    %45 = vector.load %arg14[%c0_34, %c0_35] : memref<128x128xbf16, #tpu.memory_space<vmem>>, vector<128x128xbf16>
    %cst_36 = arith.constant dense<0.000000e+00> : vector<128x128xf32>
    %46 = tpu.matmul %45, %44, %cst_36 {dimension_numbers = #tpu.dot_dimension_numbers<[1], [0], [0], [1], [0, 0, 1, 1], [], []>} : vector<128x128xbf16>, vector<128x128xbf16>, vector<128x128xf32> -> vector<128x128xf32>
    %c0_37 = arith.constant 0 : index
    %c0_38 = arith.constant 0 : index
    %47 = vector.load %arg15[%c0_37, %c0_38] : memref<128x1xf32, #tpu.memory_space<vmem>>, vector<128x1xf32>
    %48 = vector.broadcast %47 : vector<128x1xf32> to vector<128x128xf32>
    %49 = arith.addf %46, %48 : vector<128x128xf32>
    %cst_39 = arith.constant 0.000000e+00 : f32
    %50 = vector.broadcast %cst_39 : f32 to vector<128x128xf32>
    %51 = arith.maximumf %49, %50 : vector<128x128xf32>
    %52 = arith.truncf %51 : vector<128x128xf32> to vector<128x128xbf16>
    %c0_40 = arith.constant 0 : index
    %c0_41 = arith.constant 0 : index
    %53 = vector.load %arg16[%c0_40, %c0_41] : memref<128x128xbf16, #tpu.memory_space<vmem>>, vector<128x128xbf16>
    %cst_42 = arith.constant dense<0.000000e+00> : vector<128x128xf32>
    %54 = tpu.matmul %53, %52, %cst_42 {dimension_numbers = #tpu.dot_dimension_numbers<[1], [0], [0], [1], [0, 0, 1, 1], [], []>} : vector<128x128xbf16>, vector<128x128xbf16>, vector<128x128xf32> -> vector<128x128xf32>
    %c0_43 = arith.constant 0 : index
    %c0_44 = arith.constant 0 : index
    %55 = vector.load %arg17[%c0_43, %c0_44] : memref<128x1xf32, #tpu.memory_space<vmem>>, vector<128x1xf32>
    %56 = vector.broadcast %55 : vector<128x1xf32> to vector<128x128xf32>
    %57 = arith.addf %54, %56 : vector<128x128xf32>
    %cst_45 = arith.constant 0.000000e+00 : f32
    %58 = vector.broadcast %cst_45 : f32 to vector<128x128xf32>
    %59 = arith.maximumf %57, %58 : vector<128x128xf32>
    %60 = arith.truncf %59 : vector<128x128xf32> to vector<128x128xbf16>
    %c0_46 = arith.constant 0 : index
    %c0_47 = arith.constant 0 : index
    %61 = vector.load %arg18[%c0_46, %c0_47] : memref<64x128xbf16, #tpu.memory_space<vmem>>, vector<64x128xbf16>
    %cst_48 = arith.constant dense<0.000000e+00> : vector<64x128xf32>
    %62 = tpu.matmul %61, %60, %cst_48 {dimension_numbers = #tpu.dot_dimension_numbers<[1], [0], [0], [1], [0, 0, 1, 1], [], []>} : vector<64x128xbf16>, vector<128x128xbf16>, vector<64x128xf32> -> vector<64x128xf32>
    %c0_49 = arith.constant 0 : index
    %c0_50 = arith.constant 0 : index
    %63 = vector.load %arg19[%c0_49, %c0_50] : memref<64x1xf32, #tpu.memory_space<vmem>>, vector<64x1xf32>
    %64 = vector.broadcast %63 : vector<64x1xf32> to vector<64x128xf32>
    %65 = arith.addf %62, %64 : vector<64x128xf32>
    %cst_51 = arith.constant 0.000000e+00 : f32
    %66 = vector.broadcast %cst_51 : f32 to vector<64x128xf32>
    %67 = arith.maximumf %65, %66 : vector<64x128xf32>
    %68 = arith.truncf %67 : vector<64x128xf32> to vector<64x128xbf16>
    %c0_52 = arith.constant 0 : index
    %c0_53 = arith.constant 0 : index
    %69 = vector.load %arg20[%c0_52, %c0_53] : memref<16x64xbf16, #tpu.memory_space<vmem>>, vector<16x64xbf16>
    %cst_54 = arith.constant dense<0.000000e+00> : vector<16x128xf32>
    %70 = tpu.matmul %69, %68, %cst_54 {dimension_numbers = #tpu.dot_dimension_numbers<[1], [0], [0], [1], [0, 0, 1, 1], [], []>} : vector<16x64xbf16>, vector<64x128xbf16>, vector<16x128xf32> -> vector<16x128xf32>
    %c0_55 = arith.constant 0 : index
    %c0_56 = arith.constant 0 : index
    %71 = vector.load %arg21[%c0_55, %c0_56] : memref<16x1xf32, #tpu.memory_space<vmem>>, vector<16x1xf32>
    %72 = vector.broadcast %71 : vector<16x1xf32> to vector<16x128xf32>
    %73 = arith.addf %70, %72 : vector<16x128xf32>
    %74 = arith.truncf %73 : vector<16x128xf32> to vector<16x128xbf16>
    %c0_57 = arith.constant 0 : index
    %c0_58 = arith.constant 0 : index
    %c0_59 = arith.constant 0 : index
    %75 = vector.load %arg22[%c0_57, %c0_58, %c0_59] : memref<1x16x128xbf16, #tpu.memory_space<vmem>>, vector<1x16x128xbf16>
    %76 = vector.shape_cast %75 : vector<1x16x128xbf16> to vector<16x128xbf16>
    %77 = vector.shape_cast %74 : vector<16x128xbf16> to vector<1x16x128xbf16>
    tpu.vector_store %arg22[%c0_57, %c0_58, %c0_59], %77 {strides = array<i32>} : memref<1x16x128xbf16, #tpu.memory_space<vmem>>, vector<1x16x128xbf16>,
    %c0_60 = arith.constant 0 : index
    %c0_61 = arith.constant 0 : index
    %c0_62 = arith.constant 0 : index
    %78 = vector.load %arg23[%c0_60, %c0_61, %c0_62] : memref<1x18x128xf32, #tpu.memory_space<vmem>>, vector<1x18x128xf32>
    %79 = vector.shape_cast %78 : vector<1x18x128xf32> to vector<18x128xf32>
    %80 = vector.shape_cast %32 : vector<18x128xf32> to vector<1x18x128xf32>
    tpu.vector_store %arg23[%c0_60, %c0_61, %c0_62], %80 {strides = array<i32>} : memref<1x18x128xf32, #tpu.memory_space<vmem>>, vector<1x18x128xf32>,
    return
  }
  func.func @transform_0(%arg0: i32, %arg1: i32) -> (i32, i32, i32) {
    %c0_i32 = arith.constant 0 : i32
    %c0_i32_0 = arith.constant 0 : i32
    return %arg0, %c0_i32, %arg1 : i32, i32, i32
  }
  func.func @transform_1(%arg0: i32, %arg1: i32) -> (i32, i32) {
    %c0_i32 = arith.constant 0 : i32
    %c0_i32_0 = arith.constant 0 : i32
    %c0_i32_1 = arith.constant 0 : i32
    return %c0_i32, %c0_i32_0 : i32, i32
  }
  func.func @transform_2(%arg0: i32, %arg1: i32) -> (i32, i32) {
    %c0_i32 = arith.constant 0 : i32
    %c0_i32_0 = arith.constant 0 : i32
    %c0_i32_1 = arith.constant 0 : i32
    return %c0_i32, %c0_i32_0 : i32, i32
  }
  func.func @transform_3(%arg0: i32, %arg1: i32) -> (i32, i32) {
    %c0_i32 = arith.constant 0 : i32
    %c0_i32_0 = arith.constant 0 : i32
    %c0_i32_1 = arith.constant 0 : i32
    return %c0_i32, %c0_i32_0 : i32, i32
  }
  func.func @transform_4(%arg0: i32, %arg1: i32) -> (i32, i32) {
    %c0_i32 = arith.constant 0 : i32
    %c0_i32_0 = arith.constant 0 : i32
    %c0_i32_1 = arith.constant 0 : i32
    return %c0_i32, %c0_i32_0 : i32, i32
  }
  func.func @transform_5(%arg0: i32, %arg1: i32) -> (i32, i32) {
    %c0_i32 = arith.constant 0 : i32
    %c0_i32_0 = arith.constant 0 : i32
    %c0_i32_1 = arith.constant 0 : i32
    return %c0_i32, %c0_i32_0 : i32, i32
  }
  func.func @transform_6(%arg0: i32, %arg1: i32) -> (i32, i32) {
    %c0_i32 = arith.constant 0 : i32
    %c0_i32_0 = arith.constant 0 : i32
    %c0_i32_1 = arith.constant 0 : i32
    return %c0_i32, %c0_i32_0 : i32, i32
  }
  func.func @transform_7(%arg0: i32, %arg1: i32) -> (i32, i32) {
    %c0_i32 = arith.constant 0 : i32
    %c0_i32_0 = arith.constant 0 : i32
    %c0_i32_1 = arith.constant 0 : i32
    return %c0_i32, %c0_i32_0 : i32, i32
  }
  func.func @transform_8(%arg0: i32, %arg1: i32) -> (i32, i32) {
    %c0_i32 = arith.constant 0 : i32
    %c0_i32_0 = arith.constant 0 : i32
    %c0_i32_1 = arith.constant 0 : i32
    return %c0_i32, %c0_i32_0 : i32, i32
  }
  func.func @transform_9(%arg0: i32, %arg1: i32) -> (i32, i32) {
    %c0_i32 = arith.constant 0 : i32
    %c0_i32_0 = arith.constant 0 : i32
    %c0_i32_1 = arith.constant 0 : i32
    return %c0_i32, %c0_i32_0 : i32, i32
  }
  func.func @transform_10(%arg0: i32, %arg1: i32) -> (i32, i32) {
    %c0_i32 = arith.constant 0 : i32
    %c0_i32_0 = arith.constant 0 : i32
    %c0_i32_1 = arith.constant 0 : i32
    return %c0_i32, %c0_i32_0 : i32, i32
  }
  func.func @transform_11(%arg0: i32, %arg1: i32) -> (i32, i32) {
    %c0_i32 = arith.constant 0 : i32
    %c0_i32_0 = arith.constant 0 : i32
    %c0_i32_1 = arith.constant 0 : i32
    return %c0_i32, %c0_i32_0 : i32, i32
  }
  func.func @transform_12(%arg0: i32, %arg1: i32) -> (i32, i32) {
    %c0_i32 = arith.constant 0 : i32
    %c0_i32_0 = arith.constant 0 : i32
    %c0_i32_1 = arith.constant 0 : i32
    return %c0_i32, %c0_i32_0 : i32, i32
  }
  func.func @transform_13(%arg0: i32, %arg1: i32) -> (i32, i32) {
    %c0_i32 = arith.constant 0 : i32
    %c0_i32_0 = arith.constant 0 : i32
    %c0_i32_1 = arith.constant 0 : i32
    return %c0_i32, %c0_i32_0 : i32, i32
  }
  func.func @transform_14(%arg0: i32, %arg1: i32) -> (i32, i32) {
    %c0_i32 = arith.constant 0 : i32
    %c0_i32_0 = arith.constant 0 : i32
    %c0_i32_1 = arith.constant 0 : i32
    return %c0_i32, %c0_i32_0 : i32, i32
  }
  func.func @transform_15(%arg0: i32, %arg1: i32) -> (i32, i32) {
    %c0_i32 = arith.constant 0 : i32
    %c0_i32_0 = arith.constant 0 : i32
    %c0_i32_1 = arith.constant 0 : i32
    return %c0_i32, %c0_i32_0 : i32, i32
  }
  func.func @transform_16(%arg0: i32, %arg1: i32) -> (i32, i32) {
    %c0_i32 = arith.constant 0 : i32
    %c0_i32_0 = arith.constant 0 : i32
    %c0_i32_1 = arith.constant 0 : i32
    return %c0_i32, %c0_i32_0 : i32, i32
  }
  func.func @transform_17(%arg0: i32, %arg1: i32) -> (i32, i32) {
    %c0_i32 = arith.constant 0 : i32
    %c0_i32_0 = arith.constant 0 : i32
    %c0_i32_1 = arith.constant 0 : i32
    return %c0_i32, %c0_i32_0 : i32, i32
  }
  func.func @transform_18(%arg0: i32, %arg1: i32) -> (i32, i32) {
    %c0_i32 = arith.constant 0 : i32
    %c0_i32_0 = arith.constant 0 : i32
    %c0_i32_1 = arith.constant 0 : i32
    return %c0_i32, %c0_i32_0 : i32, i32
  }
  func.func @transform_19(%arg0: i32, %arg1: i32) -> (i32, i32) {
    %c0_i32 = arith.constant 0 : i32
    %c0_i32_0 = arith.constant 0 : i32
    %c0_i32_1 = arith.constant 0 : i32
    return %c0_i32, %c0_i32_0 : i32, i32
  }
  func.func @transform_20(%arg0: i32, %arg1: i32) -> (i32, i32, i32) {
    %c0_i32 = arith.constant 0 : i32
    %c0_i32_0 = arith.constant 0 : i32
    return %arg0, %c0_i32, %arg1 : i32, i32, i32
  }
  func.func @transform_21(%arg0: i32, %arg1: i32) -> (i32, i32, i32) {
    %c0_i32 = arith.constant 0 : i32
    %c0_i32_0 = arith.constant 0 : i32
    return %arg0, %c0_i32, %arg1 : i32, i32, i32
  }
}

</mosaic_0001>

<llo_original>
// kernel: tpu_custom_call.1
$region0: #{tpu_custom_call.1}
  #allocation0 [shape = 'u32[]', space=smem, size = 0x4, offset = 0x4, fixed_abs, tag = 'smem constant byte address 0x4 - core index']
  #allocation1 [shape = 'u32[144,128]{1,0:T(1,128)}', space=vmem, size = 0x12000, scoped, tag = 'internal scratch']
  %s0 = inlined_call_operand.vmem [shape: bf16[2,8,128], index: 0, kind: input, shape index: {}]
  %s1 = inlined_call_operand.vmem [shape: bf16[32,8], index: 1, kind: input, shape index: {}]
  %s2 = inlined_call_operand.vmem [shape: f32[32,1], index: 2, kind: input, shape index: {}]
  %s3 = inlined_call_operand.vmem [shape: bf16[64,32], index: 3, kind: input, shape index: {}]
  %s4 = inlined_call_operand.vmem [shape: f32[64,1], index: 4, kind: input, shape index: {}]
  %s5 = inlined_call_operand.vmem [shape: bf16[192,64], index: 5, kind: input, shape index: {}]
  %s6 = inlined_call_operand.vmem [shape: f32[192,1], index: 6, kind: input, shape index: {}]
  %s7 = inlined_call_operand.vmem [shape: bf16[18,192], index: 7, kind: input, shape index: {}]
  %s8 = inlined_call_operand.vmem [shape: f32[18,1], index: 8, kind: input, shape index: {}]
  %s9 = inlined_call_operand.vmem [shape: bf16[128,64], index: 9, kind: input, shape index: {}]
  %s10 = inlined_call_operand.vmem [shape: bf16[128,18], index: 10, kind: input, shape index: {}]
  %s11 = inlined_call_operand.vmem [shape: f32[128,1], index: 11, kind: input, shape index: {}]
  %s12 = inlined_call_operand.vmem [shape: bf16[128,128], index: 12, kind: input, shape index: {}]
  %s13 = inlined_call_operand.vmem [shape: f32[128,1], index: 13, kind: input, shape index: {}]
  %s14 = inlined_call_operand.vmem [shape: bf16[128,128], index: 14, kind: input, shape index: {}]
  %s15 = inlined_call_operand.vmem [shape: f32[128,1], index: 15, kind: input, shape index: {}]
  %s16 = inlined_call_operand.vmem [shape: bf16[64,128], index: 16, kind: input, shape index: {}]
  %s17 = inlined_call_operand.vmem [shape: f32[64,1], index: 17, kind: input, shape index: {}]
  %s18 = inlined_call_operand.vmem [shape: bf16[16,64], index: 18, kind: input, shape index: {}]
  %s19 = inlined_call_operand.vmem [shape: f32[16,1], index: 19, kind: input, shape index: {}]
  %s20 = inlined_call_operand.hbm [shape: bf16[2,16,128], index: 20, kind: output, shape index: {0}]
  %s21 = inlined_call_operand.vmem [shape: f32[2,18,128], index: 21, kind: output, shape index: {1}]
  %22 = xla_tuple %s20, %s21
  %s23 = sld [smem:[#allocation0]]
  $region121: #{tpu_custom_call.1} parent=0
    _
  %s25 = ssub.s32 1, %s23
  %s26 = scalar_select 0, %s25, %s23
  $region1: #{tpu_custom_call.1} parent=0
    #allocation2 [shape = 'u8[8192]{0}', space=vmem, size = 0x2000, scoped, tag = 'output window, operand 0']
    #allocation3 [shape = 's32[2]{0}', space=sflag, size = 0x8, scoped, tag = 'scoped memory for tpu_custom_call.1']
    %27 = vsyncpa [#allocation3], 0
    %s28 = scalar_lea.sflag [#allocation3], 1
    %29 = vsyncpa %s28, 0
    loop: start=0, step=1, limit=4
    $region2: #{tpu_custom_call.1} parent=1 // loop_pre_header
      _
    $region3: #{tpu_custom_call.1} parent=1 // loop_header
      %s31 = sphi 0, %s35
      %p32 = scmp.ge.s32.totalorder %s31, 4
      %s38 = sphi 0, %s50
      %s39 = sphi 0, %s46
      %s40 = sphi 0, %s38
      %s41 = sphi 0, %s39
      %s42 = sphi 0, %s40
      %s43 = sphi 0, %s41
      %s55 = sphi 0, %s57
      %s58 = sphi 0, %s55
      %s59 = sphi 0, %s58
      %s75 = sphi 0, %s59
      %s79 = sphi 0, %s79
      %s81 = sphi 0, %s79
      %s82 = sphi 0, %s81
      %s96 = sphi 0, %s82
      %s100 = sphi 0, %s100
      %s102 = sphi 0, %s100
      %s103 = sphi 0, %s102
      %s117 = sphi 0, %s103
      %s121 = sphi 0, %s121
      %s123 = sphi 0, %s121
      %s124 = sphi 0, %s123
      %s138 = sphi 0, %s124
      %s142 = sphi 0, %s142
      %s144 = sphi 0, %s142
      %s145 = sphi 0, %s144
      %s159 = sphi 0, %s145
      %s163 = sphi 0, %s163
      %s165 = sphi 0, %s163
      %s166 = sphi 0, %s165
      %s180 = sphi 0, %s166
      %s184 = sphi 0, %s184
      %s186 = sphi 0, %s184
      %s187 = sphi 0, %s186
      %s201 = sphi 0, %s187
      %s205 = sphi 0, %s205
      %s207 = sphi 0, %s205
      %s208 = sphi 0, %s207
      %s222 = sphi 0, %s208
      %s226 = sphi 0, %s226
      %s228 = sphi 0, %s226
      %s229 = sphi 0, %s228
      %s243 = sphi 0, %s229
      %s247 = sphi 0, %s247
      %s249 = sphi 0, %s247
      %s250 = sphi 0, %s249
      %s264 = sphi 0, %s250
      %s268 = sphi 0, %s268
      %s270 = sphi 0, %s268
      %s271 = sphi 0, %s270
      %s285 = sphi 0, %s271
      %s289 = sphi 0, %s289
      %s291 = sphi 0, %s289
      %s292 = sphi 0, %s291
      %s306 = sphi 0, %s292
      %s310 = sphi 0, %s310
      %s312 = sphi 0, %s310
      %s313 = sphi 0, %s312
      %s327 = sphi 0, %s313
      %s331 = sphi 0, %s331
      %s333 = sphi 0, %s331
      %s334 = sphi 0, %s333
      %s348 = sphi 0, %s334
      %s352 = sphi 0, %s352
      %s354 = sphi 0, %s352
      %s355 = sphi 0, %s354
      %s369 = sphi 0, %s355
      %s373 = sphi 0, %s373
      %s375 = sphi 0, %s373
      %s376 = sphi 0, %s375
      %s390 = sphi 0, %s376
      %s394 = sphi 0, %s394
      %s396 = sphi 0, %s394
      %s397 = sphi 0, %s396
      %s411 = sphi 0, %s397
      %s415 = sphi 0, %s415
      %s417 = sphi 0, %s415
      %s418 = sphi 0, %s417
      %s432 = sphi 0, %s418
      %s436 = sphi 0, %s436
      %s438 = sphi 0, %s436
      %s439 = sphi 0, %s438
      %s453 = sphi 0, %s439
      %s457 = sphi 0, %s457
      %s459 = sphi 0, %s457
      %s460 = sphi 0, %s459
      %s474 = sphi 0, %s460
      %s482 = sphi 0, %s484
      %s485 = sphi 0, %s482
      %s486 = sphi 0, %s485
      %s502 = sphi 0, %s486
      %s510 = sphi 0, %s512
      %s513 = sphi 0, %s510
      %s514 = sphi 0, %s513
      %s530 = sphi 0, %s514
    $region4: #{tpu_custom_call.1} parent=1 // loop_header_branch
      %34 = sbr.rel (%p32) target = $region8
    $region5: #{tpu_custom_call.1} parent=1 // loop_body
      %s36 = ssub.s32 %s31, 1
      %s37 = ssub.s32 %s31, 2
      %s44 = sadd.s32 1, %s39
      %p45 = scmp.ge.s32.totalorder %s44, 1
      %s46 = scalar_select %p45, 0, %s44
      %s47 = sadd.s32 1, %s38
      %s48 = scalar_select %p45, %s47, %s38
      %p49 = scmp.ge.s32.totalorder %s48, 2
      %s50 = scalar_select %p49, 0, %s48
      %s51 = ssub.s32 %s38, %s50
      %s52 = ssub.s32 %s39, %s46
      %s53 = sor.u32 %s51, %s52
      %p54 = scmp.eq.s32.totalorder %s53, 0
      %s56 = sadd.s32 %s55, 1
      %s57 = scalar_select %p54, %s55, %s56
      %p60 = pneg %p54
      %p61 = scmp.eq.s32.totalorder %s31, 1
      %p62 = por %p60, %p61
      %p63 = scmp.ne.s32.totalorder %s55, %s58
      %p64 = scmp.eq.s32.totalorder %s31, 0
      %p65 = por %p63, %p64
      %p66 = scmp.ne.s32.totalorder %s55, %s58
      %p67 = scmp.eq.s32.totalorder %s36, 1
      %p68 = por %p66, %p67
      %p69 = scmp.ne.s32.totalorder %s58, %s59
      %p70 = scmp.eq.s32.totalorder %s36, 0
      %p71 = por %p69, %p70
      %p72 = scmp.ne.s32.totalorder %s58, %s59
      %p73 = scmp.eq.s32.totalorder %s37, 1
      %p74 = por %p72, %p73
      %p76 = scmp.ne.s32.totalorder %s59, %s75
      %p77 = scmp.eq.s32.totalorder %s37, 0
      %p78 = por %p76, %p77
      %s80 = sadd.s32 %s79, 1
      %p83 = scmp.eq.s32.totalorder %s31, 1
      %p84 = scmp.ne.s32.totalorder %s79, %s81
      %p85 = scmp.eq.s32.totalorder %s31, 0
      %p86 = por %p84, %p85
      %p87 = scmp.ne.s32.totalorder %s79, %s81
      %p88 = scmp.eq.s32.totalorder %s36, 1
      %p89 = por %p87, %p88
      %p90 = scmp.ne.s32.totalorder %s81, %s82
      %p91 = scmp.eq.s32.totalorder %s36, 0
      %p92 = por %p90, %p91
      %p93 = scmp.ne.s32.totalorder %s81, %s82
      %p94 = scmp.eq.s32.totalorder %s37, 1
      %p95 = por %p93, %p94
      %p97 = scmp.ne.s32.totalorder %s82, %s96
      %p98 = scmp.eq.s32.totalorder %s37, 0
      %p99 = por %p97, %p98
      %s101 = sadd.s32 %s100, 1
      %p104 = scmp.eq.s32.totalorder %s31, 1
      %p105 = scmp.ne.s32.totalorder %s100, %s102
      %p106 = scmp.eq.s32.totalorder %s31, 0
      %p107 = por %p105, %p106
      %p108 = scmp.ne.s32.totalorder %s100, %s102
      %p109 = scmp.eq.s32.totalorder %s36, 1
      %p110 = por %p108, %p109
      %p111 = scmp.ne.s32.totalorder %s102, %s103
      %p112 = scmp.eq.s32.totalorder %s36, 0
      %p113 = por %p111, %p112
      %p114 = scmp.ne.s32.totalorder %s102, %s103
      %p115 = scmp.eq.s32.totalorder %s37, 1
      %p116 = por %p114, %p115
      %p118 = scmp.ne.s32.totalorder %s103, %s117
      %p119 = scmp.eq.s32.totalorder %s37, 0
      %p120 = por %p118, %p119
      %s122 = sadd.s32 %s121, 1
      %p125 = scmp.eq.s32.totalorder %s31, 1
      %p126 = scmp.ne.s32.totalorder %s121, %s123
      %p127 = scmp.eq.s32.totalorder %s31, 0
      %p128 = por %p126, %p127
      %p129 = scmp.ne.s32.totalorder %s121, %s123
      %p130 = scmp.eq.s32.totalorder %s36, 1
      %p131 = por %p129, %p130
      %p132 = scmp.ne.s32.totalorder %s123, %s124
      %p133 = scmp.eq.s32.totalorder %s36, 0
      %p134 = por %p132, %p133
      %p135 = scmp.ne.s32.totalorder %s123, %s124
      %p136 = scmp.eq.s32.totalorder %s37, 1
      %p137 = por %p135, %p136
      %p139 = scmp.ne.s32.totalorder %s124, %s138
      %p140 = scmp.eq.s32.totalorder %s37, 0
      %p141 = por %p139, %p140
      %s143 = sadd.s32 %s142, 1
      %p146 = scmp.eq.s32.totalorder %s31, 1
      %p147 = scmp.ne.s32.totalorder %s142, %s144
      %p148 = scmp.eq.s32.totalorder %s31, 0
      %p149 = por %p147, %p148
      %p150 = scmp.ne.s32.totalorder %s142, %s144
      %p151 = scmp.eq.s32.totalorder %s36, 1
      %p152 = por %p150, %p151
      %p153 = scmp.ne.s32.totalorder %s144, %s145
      %p154 = scmp.eq.s32.totalorder %s36, 0
      %p155 = por %p153, %p154
      %p156 = scmp.ne.s32.totalorder %s144, %s145
      %p157 = scmp.eq.s32.totalorder %s37, 1
      %p158 = por %p156, %p157
      %p160 = scmp.ne.s32.totalorder %s145, %s159
      %p161 = scmp.eq.s32.totalorder %s37, 0
      %p162 = por %p160, %p161
      %s164 = sadd.s32 %s163, 1
      %p167 = scmp.eq.s32.totalorder %s31, 1
      %p168 = scmp.ne.s32.totalorder %s163, %s165
      %p169 = scmp.eq.s32.totalorder %s31, 0
      %p170 = por %p168, %p169
      %p171 = scmp.ne.s32.totalorder %s163, %s165
      %p172 = scmp.eq.s32.totalorder %s36, 1
      %p173 = por %p171, %p172
      %p174 = scmp.ne.s32.totalorder %s165, %s166
      %p175 = scmp.eq.s32.totalorder %s36, 0
      %p176 = por %p174, %p175
      %p177 = scmp.ne.s32.totalorder %s165, %s166
      %p178 = scmp.eq.s32.totalorder %s37, 1
      %p179 = por %p177, %p178
      %p181 = scmp.ne.s32.totalorder %s166, %s180
      %p182 = scmp.eq.s32.totalorder %s37, 0
      %p183 = por %p181, %p182
      %s185 = sadd.s32 %s184, 1
      %p188 = scmp.eq.s32.totalorder %s31, 1
      %p189 = scmp.ne.s32.totalorder %s184, %s186
      %p190 = scmp.eq.s32.totalorder %s31, 0
      %p191 = por %p189, %p190
      %p192 = scmp.ne.s32.totalorder %s184, %s186
      %p193 = scmp.eq.s32.totalorder %s36, 1
      %p194 = por %p192, %p193
      %p195 = scmp.ne.s32.totalorder %s186, %s187
      %p196 = scmp.eq.s32.totalorder %s36, 0
      %p197 = por %p195, %p196
      %p198 = scmp.ne.s32.totalorder %s186, %s187
      %p199 = scmp.eq.s32.totalorder %s37, 1
      %p200 = por %p198, %p199
      %p202 = scmp.ne.s32.totalorder %s187, %s201
      %p203 = scmp.eq.s32.totalorder %s37, 0
      %p204 = por %p202, %p203
      %s206 = sadd.s32 %s205, 1
      %p209 = scmp.eq.s32.totalorder %s31, 1
      %p210 = scmp.ne.s32.totalorder %s205, %s207
      %p211 = scmp.eq.s32.totalorder %s31, 0
      %p212 = por %p210, %p211
      %p213 = scmp.ne.s32.totalorder %s205, %s207
      %p214 = scmp.eq.s32.totalorder %s36, 1
      %p215 = por %p213, %p214
      %p216 = scmp.ne.s32.totalorder %s207, %s208
      %p217 = scmp.eq.s32.totalorder %s36, 0
      %p218 = por %p216, %p217
      %p219 = scmp.ne.s32.totalorder %s207, %s208
      %p220 = scmp.eq.s32.totalorder %s37, 1
      %p221 = por %p219, %p220
      %p223 = scmp.ne.s32.totalorder %s208, %s222
      %p224 = scmp.eq.s32.totalorder %s37, 0
      %p225 = por %p223, %p224
      %s227 = sadd.s32 %s226, 1
      %p230 = scmp.eq.s32.totalorder %s31, 1
      %p231 = scmp.ne.s32.totalorder %s226, %s228
      %p232 = scmp.eq.s32.totalorder %s31, 0
      %p233 = por %p231, %p232
      %p234 = scmp.ne.s32.totalorder %s226, %s228
      %p235 = scmp.eq.s32.totalorder %s36, 1
      %p236 = por %p234, %p235
      %p237 = scmp.ne.s32.totalorder %s228, %s229
      %p238 = scmp.eq.s32.totalorder %s36, 0
      %p239 = por %p237, %p238
      %p240 = scmp.ne.s32.totalorder %s228, %s229
      %p241 = scmp.eq.s32.totalorder %s37, 1
      %p242 = por %p240, %p241
      %p244 = scmp.ne.s32.totalorder %s229, %s243
      %p245 = scmp.eq.s32.totalorder %s37, 0
      %p246 = por %p244, %p245
      %s248 = sadd.s32 %s247, 1
      %p251 = scmp.eq.s32.totalorder %s31, 1
      %p252 = scmp.ne.s32.totalorder %s247, %s249
      %p253 = scmp.eq.s32.totalorder %s31, 0
      %p254 = por %p252, %p253
      %p255 = scmp.ne.s32.totalorder %s247, %s249
      %p256 = scmp.eq.s32.totalorder %s36, 1
      %p257 = por %p255, %p256
      %p258 = scmp.ne.s32.totalorder %s249, %s250
      %p259 = scmp.eq.s32.totalorder %s36, 0
      %p260 = por %p258, %p259
      %p261 = scmp.ne.s32.totalorder %s249, %s250
      %p262 = scmp.eq.s32.totalorder %s37, 1
      %p263 = por %p261, %p262
      %p265 = scmp.ne.s32.totalorder %s250, %s264
      %p266 = scmp.eq.s32.totalorder %s37, 0
      %p267 = por %p265, %p266
      %s269 = sadd.s32 %s268, 1
      %p272 = scmp.eq.s32.totalorder %s31, 1
      %p273 = scmp.ne.s32.totalorder %s268, %s270
      %p274 = scmp.eq.s32.totalorder %s31, 0
      %p275 = por %p273, %p274
      %p276 = scmp.ne.s32.totalorder %s268, %s270
      %p277 = scmp.eq.s32.totalorder %s36, 1
      %p278 = por %p276, %p277
      %p279 = scmp.ne.s32.totalorder %s270, %s271
      %p280 = scmp.eq.s32.totalorder %s36, 0
      %p281 = por %p279, %p280
      %p282 = scmp.ne.s32.totalorder %s270, %s271
      %p283 = scmp.eq.s32.totalorder %s37, 1
      %p284 = por %p282, %p283
      %p286 = scmp.ne.s32.totalorder %s271, %s285
      %p287 = scmp.eq.s32.totalorder %s37, 0
      %p288 = por %p286, %p287
      %s290 = sadd.s32 %s289, 1
      %p293 = scmp.eq.s32.totalorder %s31, 1
      %p294 = scmp.ne.s32.totalorder %s289, %s291
      %p295 = scmp.eq.s32.totalorder %s31, 0
      %p296 = por %p294, %p295
      %p297 = scmp.ne.s32.totalorder %s289, %s291
      %p298 = scmp.eq.s32.totalorder %s36, 1
      %p299 = por %p297, %p298
      %p300 = scmp.ne.s32.totalorder %s291, %s292
      %p301 = scmp.eq.s32.totalorder %s36, 0
      %p302 = por %p300, %p301
      %p303 = scmp.ne.s32.totalorder %s291, %s292
      %p304 = scmp.eq.s32.totalorder %s37, 1
      %p305 = por %p303, %p304
      %p307 = scmp.ne.s32.totalorder %s292, %s306
      %p308 = scmp.eq.s32.totalorder %s37, 0
      %p309 = por %p307, %p308
      %s311 = sadd.s32 %s310, 1
      %p314 = scmp.eq.s32.totalorder %s31, 1
      %p315 = scmp.ne.s32.totalorder %s310, %s312
      %p316 = scmp.eq.s32.totalorder %s31, 0
      %p317 = por %p315, %p316
      %p318 = scmp.ne.s32.totalorder %s310, %s312
      %p319 = scmp.eq.s32.totalorder %s36, 1
      %p320 = por %p318, %p319
      %p321 = scmp.ne.s32.totalorder %s312, %s313
      %p322 = scmp.eq.s32.totalorder %s36, 0
      %p323 = por %p321, %p322
      %p324 = scmp.ne.s32.totalorder %s312, %s313
      %p325 = scmp.eq.s32.totalorder %s37, 1
      %p326 = por %p324, %p325
      %p328 = scmp.ne.s32.totalorder %s313, %s327
      %p329 = scmp.eq.s32.totalorder %s37, 0
      %p330 = por %p328, %p329
      %s332 = sadd.s32 %s331, 1
      %p335 = scmp.eq.s32.totalorder %s31, 1
      %p336 = scmp.ne.s32.totalorder %s331, %s333
      %p337 = scmp.eq.s32.totalorder %s31, 0
      %p338 = por %p336, %p337
      %p339 = scmp.ne.s32.totalorder %s331, %s333
      %p340 = scmp.eq.s32.totalorder %s36, 1
      %p341 = por %p339, %p340
      %p342 = scmp.ne.s32.totalorder %s333, %s334
      %p343 = scmp.eq.s32.totalorder %s36, 0
      %p344 = por %p342, %p343
      %p345 = scmp.ne.s32.totalorder %s333, %s334
      %p346 = scmp.eq.s32.totalorder %s37, 1
      %p347 = por %p345, %p346
      %p349 = scmp.ne.s32.totalorder %s334, %s348
      %p350 = scmp.eq.s32.totalorder %s37, 0
      %p351 = por %p349, %p350
      %s353 = sadd.s32 %s352, 1
      %p356 = scmp.eq.s32.totalorder %s31, 1
      %p357 = scmp.ne.s32.totalorder %s352, %s354
      %p358 = scmp.eq.s32.totalorder %s31, 0
      %p359 = por %p357, %p358
      %p360 = scmp.ne.s32.totalorder %s352, %s354
      %p361 = scmp.eq.s32.totalorder %s36, 1
      %p362 = por %p360, %p361
      %p363 = scmp.ne.s32.totalorder %s354, %s355
      %p364 = scmp.eq.s32.totalorder %s36, 0
      %p365 = por %p363, %p364
      %p366 = scmp.ne.s32.totalorder %s354, %s355
      %p367 = scmp.eq.s32.totalorder %s37, 1
      %p368 = por %p366, %p367
      %p370 = scmp.ne.s32.totalorder %s355, %s369
      %p371 = scmp.eq.s32.totalorder %s37, 0
      %p372 = por %p370, %p371
      %s374 = sadd.s32 %s373, 1
      %p377 = scmp.eq.s32.totalorder %s31, 1
      %p378 = scmp.ne.s32.totalorder %s373, %s375
      %p379 = scmp.eq.s32.totalorder %s31, 0
      %p380 = por %p378, %p379
      %p381 = scmp.ne.s32.totalorder %s373, %s375
      %p382 = scmp.eq.s32.totalorder %s36, 1
      %p383 = por %p381, %p382
      %p384 = scmp.ne.s32.totalorder %s375, %s376
      %p385 = scmp.eq.s32.totalorder %s36, 0
      %p386 = por %p384, %p385
      %p387 = scmp.ne.s32.totalorder %s375, %s376
      %p388 = scmp.eq.s32.totalorder %s37, 1
      %p389 = por %p387, %p388
      %p391 = scmp.ne.s32.totalorder %s376, %s390
      %p392 = scmp.eq.s32.totalorder %s37, 0
      %p393 = por %p391, %p392
      %s395 = sadd.s32 %s394, 1
      %p398 = scmp.eq.s32.totalorder %s31, 1
      %p399 = scmp.ne.s32.totalorder %s394, %s396
      %p400 = scmp.eq.s32.totalorder %s31, 0
      %p401 = por %p399, %p400
      %p402 = scmp.ne.s32.totalorder %s394, %s396
      %p403 = scmp.eq.s32.totalorder %s36, 1
      %p404 = por %p402, %p403
      %p405 = scmp.ne.s32.totalorder %s396, %s397
      %p406 = scmp.eq.s32.totalorder %s36, 0
      %p407 = por %p405, %p406
      %p408 = scmp.ne.s32.totalorder %s396, %s397
      %p409 = scmp.eq.s32.totalorder %s37, 1
      %p410 = por %p408, %p409
      %p412 = scmp.ne.s32.totalorder %s397, %s411
      %p413 = scmp.eq.s32.totalorder %s37, 0
      %p414 = por %p412, %p413
      %s416 = sadd.s32 %s415, 1
      %p419 = scmp.eq.s32.totalorder %s31, 1
      %p420 = scmp.ne.s32.totalorder %s415, %s417
      %p421 = scmp.eq.s32.totalorder %s31, 0
      %p422 = por %p420, %p421
      %p423 = scmp.ne.s32.totalorder %s415, %s417
      %p424 = scmp.eq.s32.totalorder %s36, 1
      %p425 = por %p423, %p424
      %p426 = scmp.ne.s32.totalorder %s417, %s418
      %p427 = scmp.eq.s32.totalorder %s36, 0
      %p428 = por %p426, %p427
      %p429 = scmp.ne.s32.totalorder %s417, %s418
      %p430 = scmp.eq.s32.totalorder %s37, 1
      %p431 = por %p429, %p430
      %p433 = scmp.ne.s32.totalorder %s418, %s432
      %p434 = scmp.eq.s32.totalorder %s37, 0
      %p435 = por %p433, %p434
      %s437 = sadd.s32 %s436, 1
      %p440 = scmp.eq.s32.totalorder %s31, 1
      %p441 = scmp.ne.s32.totalorder %s436, %s438
      %p442 = scmp.eq.s32.totalorder %s31, 0
      %p443 = por %p441, %p442
      %p444 = scmp.ne.s32.totalorder %s436, %s438
      %p445 = scmp.eq.s32.totalorder %s36, 1
      %p446 = por %p444, %p445
      %p447 = scmp.ne.s32.totalorder %s438, %s439
      %p448 = scmp.eq.s32.totalorder %s36, 0
      %p449 = por %p447, %p448
      %p450 = scmp.ne.s32.totalorder %s438, %s439
      %p451 = scmp.eq.s32.totalorder %s37, 1
      %p452 = por %p450, %p451
      %p454 = scmp.ne.s32.totalorder %s439, %s453
      %p455 = scmp.eq.s32.totalorder %s37, 0
      %p456 = por %p454, %p455
      %s458 = sadd.s32 %s457, 1
      %p461 = scmp.eq.s32.totalorder %s31, 1
      %p462 = scmp.ne.s32.totalorder %s457, %s459
      %p463 = scmp.eq.s32.totalorder %s31, 0
      %p464 = por %p462, %p463
      %p465 = scmp.ne.s32.totalorder %s457, %s459
      %p466 = scmp.eq.s32.totalorder %s36, 1
      %p467 = por %p465, %p466
      %p468 = scmp.ne.s32.totalorder %s459, %s460
      %p469 = scmp.eq.s32.totalorder %s36, 0
      %p470 = por %p468, %p469
      %p471 = scmp.ne.s32.totalorder %s459, %s460
      %p472 = scmp.eq.s32.totalorder %s37, 1
      %p473 = por %p471, %p472
      %p475 = scmp.ne.s32.totalorder %s460, %s474
      %p476 = scmp.eq.s32.totalorder %s37, 0
      %p477 = por %p475, %p476
      %s478 = ssub.s32 %s38, %s50
      %s479 = ssub.s32 %s39, %s46
      %s480 = sor.u32 %s478, %s479
      %p481 = scmp.eq.s32.totalorder %s480, 0
      %s483 = sadd.s32 %s482, 1
      %s484 = scalar_select %p481, %s482, %s483
      %p487 = pneg %p481
      %p488 = scmp.eq.s32.totalorder %s31, 1
      %p489 = por %p487, %p488
      %p490 = scmp.ne.s32.totalorder %s482, %s485
      %p491 = scmp.eq.s32.totalorder %s31, 0
      %p492 = por %p490, %p491
      %p493 = scmp.ne.s32.totalorder %s482, %s485
      %p494 = scmp.eq.s32.totalorder %s36, 1
      %p495 = por %p493, %p494
      %p496 = scmp.ne.s32.totalorder %s485, %s486
      %p497 = scmp.eq.s32.totalorder %s36, 0
      %p498 = por %p496, %p497
      %p499 = scmp.ne.s32.totalorder %s485, %s486
      %p500 = scmp.eq.s32.totalorder %s37, 1
      %p501 = por %p499, %p500
      %p503 = scmp.ne.s32.totalorder %s486, %s502
      %p504 = scmp.eq.s32.totalorder %s37, 0
      %p505 = por %p503, %p504
      %s506 = ssub.s32 %s38, %s50
      %s507 = ssub.s32 %s39, %s46
      %s508 = sor.u32 %s506, %s507
      %p509 = scmp.eq.s32.totalorder %s508, 0
      %s511 = sadd.s32 %s510, 1
      %s512 = scalar_select %p509, %s510, %s511
      %p515 = pneg %p509
      %p516 = scmp.eq.s32.totalorder %s31, 1
      %p517 = por %p515, %p516
      %p518 = scmp.ne.s32.totalorder %s510, %s513
      %p519 = scmp.eq.s32.totalorder %s31, 0
      %p520 = por %p518, %p519
      %p521 = scmp.ne.s32.totalorder %s510, %s513
      %p522 = scmp.eq.s32.totalorder %s36, 1
      %p523 = por %p521, %p522
      %p524 = scmp.ne.s32.totalorder %s513, %s514
      %p525 = scmp.eq.s32.totalorder %s36, 0
      %p526 = por %p524, %p525
      %p527 = scmp.ne.s32.totalorder %s513, %s514
      %p528 = scmp.eq.s32.totalorder %s37, 1
      %p529 = por %p527, %p528
      %p531 = scmp.ne.s32.totalorder %s514, %s530
      %p532 = scmp.eq.s32.totalorder %s37, 0
      %p533 = por %p531, %p532
      %p534 = scmp.le.s32.totalorder 1, %s31
      %p535 = scmp.lt.s32.totalorder %s31, 3
      %p536 = pnand %p534, %p535
      %p537 = pneg %p536
      // Predicated region
      $region9: #{tpu_custom_call.1} parent=5 // pred_check
        _
      $region10: #{tpu_custom_call.1} parent=5 // pred_check_branch
        %539 = sbr.rel (%p536) target = $region12
      $region11: #{tpu_custom_call.1} parent=5 // pred_region
        %s540 = ssub.s32 %s31, 1
        // Predicated region
        $region13: #{tpu_custom_call.1} parent=11 // pred_check
          %p541 = pneg %p92
        $region14: #{tpu_custom_call.1} parent=11 // pred_check_branch
          %543 = sbr.rel (%p541) target = $region16
        $region15: #{tpu_custom_call.1} parent=11 // pred_region
          _
        $region16: #{tpu_custom_call.1} parent=11 // pred_fallthru
          _
        // Predicated region
        $region17: #{tpu_custom_call.1} parent=11 // pred_check
          %p544 = pneg %p113
        $region18: #{tpu_custom_call.1} parent=11 // pred_check_branch
          %546 = sbr.rel (%p544) target = $region20
        $region19: #{tpu_custom_call.1} parent=11 // pred_region
          _
        $region20: #{tpu_custom_call.1} parent=11 // pred_fallthru
          _
        // Predicated region
        $region21: #{tpu_custom_call.1} parent=11 // pred_check
          %p547 = pneg %p134
        $region22: #{tpu_custom_call.1} parent=11 // pred_check_branch
          %549 = sbr.rel (%p547) target = $region24
        $region23: #{tpu_custom_call.1} parent=11 // pred_region
          _
        $region24: #{tpu_custom_call.1} parent=11 // pred_fallthru
          _
        // Predicated region
        $region25: #{tpu_custom_call.1} parent=11 // pred_check
          %p550 = pneg %p155
        $region26: #{tpu_custom_call.1} parent=11 // pred_check_branch
          %552 = sbr.rel (%p550) target = $region28
        $region27: #{tpu_custom_call.1} parent=11 // pred_region
          _
        $region28: #{tpu_custom_call.1} parent=11 // pred_fallthru
          _
        // Predicated region
        $region29: #{tpu_custom_call.1} parent=11 // pred_check
          %p553 = pneg %p176
        $region30: #{tpu_custom_call.1} parent=11 // pred_check_branch
          %555 = sbr.rel (%p553) target = $region32
        $region31: #{tpu_custom_call.1} parent=11 // pred_region
          _
        $region32: #{tpu_custom_call.1} parent=11 // pred_fallthru
          _
        // Predicated region
        $region33: #{tpu_custom_call.1} parent=11 // pred_check
          %p556 = pneg %p197
        $region34: #{tpu_custom_call.1} parent=11 // pred_check_branch
          %558 = sbr.rel (%p556) target = $region36
        $region35: #{tpu_custom_call.1} parent=11 // pred_region
          _
        $region36: #{tpu_custom_call.1} parent=11 // pred_fallthru
          _
        // Predicated region
        $region37: #{tpu_custom_call.1} parent=11 // pred_check
          %p559 = pneg %p218
        $region38: #{tpu_custom_call.1} parent=11 // pred_check_branch
          %561 = sbr.rel (%p559) target = $region40
        $region39: #{tpu_custom_call.1} parent=11 // pred_region
          _
        $region40: #{tpu_custom_call.1} parent=11 // pred_fallthru
          _
        // Predicated region
        $region41: #{tpu_custom_call.1} parent=11 // pred_check
          %p562 = pneg %p239
        $region42: #{tpu_custom_call.1} parent=11 // pred_check_branch
          %564 = sbr.rel (%p562) target = $region44
        $region43: #{tpu_custom_call.1} parent=11 // pred_region
          _
        $region44: #{tpu_custom_call.1} parent=11 // pred_fallthru
          _
        // Predicated region
        $region45: #{tpu_custom_call.1} parent=11 // pred_check
          %p565 = pneg %p260
        $region46: #{tpu_custom_call.1} parent=11 // pred_check_branch
          %567 = sbr.rel (%p565) target = $region48
        $region47: #{tpu_custom_call.1} parent=11 // pred_region
          _
        $region48: #{tpu_custom_call.1} parent=11 // pred_fallthru
          _
        // Predicated region
        $region49: #{tpu_custom_call.1} parent=11 // pred_check
          %p568 = pneg %p281
        $region50: #{tpu_custom_call.1} parent=11 // pred_check_branch
          %570 = sbr.rel (%p568) target = $region52
        $region51: #{tpu_custom_call.1} parent=11 // pred_region
          _
        $region52: #{tpu_custom_call.1} parent=11 // pred_fallthru
          _
        // Predicated region
        $region53: #{tpu_custom_call.1} parent=11 // pred_check
          %p571 = pneg %p302
        $region54: #{tpu_custom_call.1} parent=11 // pred_check_branch
          %573 = sbr.rel (%p571) target = $region56
        $region55: #{tpu_custom_call.1} parent=11 // pred_region
          _
        $region56: #{tpu_custom_call.1} parent=11 // pred_fallthru
          _
        // Predicated region
        $region57: #{tpu_custom_call.1} parent=11 // pred_check
          %p574 = pneg %p323
        $region58: #{tpu_custom_call.1} parent=11 // pred_check_branch
          %576 = sbr.rel (%p574) target = $region60
        $region59: #{tpu_custom_call.1} parent=11 // pred_region
          _
        $region60: #{tpu_custom_call.1} parent=11 // pred_fallthru
          _
        // Predicated region
        $region61: #{tpu_custom_call.1} parent=11 // pred_check
          %p577 = pneg %p344
        $region62: #{tpu_custom_call.1} parent=11 // pred_check_branch
          %579 = sbr.rel (%p577) target = $region64
        $region63: #{tpu_custom_call.1} parent=11 // pred_region
          _
        $region64: #{tpu_custom_call.1} parent=11 // pred_fallthru
          _
        // Predicated region
        $region65: #{tpu_custom_call.1} parent=11 // pred_check
          %p580 = pneg %p365
        $region66: #{tpu_custom_call.1} parent=11 // pred_check_branch
          %582 = sbr.rel (%p580) target = $region68
        $region67: #{tpu_custom_call.1} parent=11 // pred_region
          _
        $region68: #{tpu_custom_call.1} parent=11 // pred_fallthru
          _
        // Predicated region
        $region69: #{tpu_custom_call.1} parent=11 // pred_check
          %p583 = pneg %p386
        $region70: #{tpu_custom_call.1} parent=11 // pred_check_branch
          %585 = sbr.rel (%p583) target = $region72
        $region71: #{tpu_custom_call.1} parent=11 // pred_region
          _
        $region72: #{tpu_custom_call.1} parent=11 // pred_fallthru
          _
        // Predicated region
        $region73: #{tpu_custom_call.1} parent=11 // pred_check
          %p586 = pneg %p407
        $region74: #{tpu_custom_call.1} parent=11 // pred_check_branch
          %588 = sbr.rel (%p586) target = $region76
        $region75: #{tpu_custom_call.1} parent=11 // pred_region
          _
        $region76: #{tpu_custom_call.1} parent=11 // pred_fallthru
          _
        // Predicated region
        $region77: #{tpu_custom_call.1} parent=11 // pred_check
          %p589 = pneg %p428
        $region78: #{tpu_custom_call.1} parent=11 // pred_check_branch
          %591 = sbr.rel (%p589) target = $region80
        $region79: #{tpu_custom_call.1} parent=11 // pred_region
          _
        $region80: #{tpu_custom_call.1} parent=11 // pred_fallthru
          _
        // Predicated region
        $region81: #{tpu_custom_call.1} parent=11 // pred_check
          %p592 = pneg %p449
        $region82: #{tpu_custom_call.1} parent=11 // pred_check_branch
          %594 = sbr.rel (%p592) target = $region84
        $region83: #{tpu_custom_call.1} parent=11 // pred_region
          _
        $region84: #{tpu_custom_call.1} parent=11 // pred_fallthru
          _
        // Predicated region
        $region85: #{tpu_custom_call.1} parent=11 // pred_check
          %p595 = pneg %p470
        $region86: #{tpu_custom_call.1} parent=11 // pred_check_branch
          %597 = sbr.rel (%p595) target = $region88
        $region87: #{tpu_custom_call.1} parent=11 // pred_region
          _
        $region88: #{tpu_custom_call.1} parent=11 // pred_fallthru
          _
      $region12: #{tpu_custom_call.1} parent=5 // pred_fallthru
        _
      %p598 = scmp.lt.s32.totalorder %s31, 2
      // Predicated region
      $region89: #{tpu_custom_call.1} parent=5 // pred_check
        %p599 = pneg %p598
      $region90: #{tpu_custom_call.1} parent=5 // pred_check_branch
        %601 = sbr.rel (%p599) target = $region92
      $region91: #{tpu_custom_call.1} parent=5 // pred_region
        // Predicated region
        $region93: #{tpu_custom_call.1} parent=91 // pred_check
          %p602 = pneg %p65
        $region94: #{tpu_custom_call.1} parent=91 // pred_check_branch
          %604 = sbr.rel (%p602) target = $region96
        $region95: #{tpu_custom_call.1} parent=91 // pred_region
          %p605 = scmp.lt.s32.totalorder %s38, 1
          %s606 = scalar_select %p605, %s38, 1
          %p607 = scmp.lt.s32.totalorder %s39, 0
          %s608 = scalar_select %p607, %s39, 0
          %s609 = sadd.s32 %s608, %s606
          %s610 = smul.addr %s609, 4
          %s611 = scalar_lea.vmem %s0, %s610
        $region96: #{tpu_custom_call.1} parent=91 // pred_fallthru
          _
      $region92: #{tpu_custom_call.1} parent=5 // pred_fallthru
        _
      %p612 = scmp.le.s32.totalorder 1, %s31
      %p613 = scmp.lt.s32.totalorder %s31, 3
      %p614 = pnand %p612, %p613
      %p615 = pneg %p614
      // Predicated region
      $region97: #{tpu_custom_call.1} parent=5 // pred_check
        _
      $region98: #{tpu_custom_call.1} parent=5 // pred_check_branch
        %617 = sbr.rel (%p614) target = $region100
      $region99: #{tpu_custom_call.1} parent=5 // pred_region
        %s618 = ssub.s32 %s31, 1
        %p619 = scmp.lt.s32.totalorder %s40, 1
        %s620 = scalar_select %p619, %s40, 1
        %p621 = scmp.lt.s32.totalorder %s41, 0
        %s622 = scalar_select %p621, %s41, 0
        %s623 = sadd.s32 %s622, %s620
        %s624 = smul.addr %s623, 4
        %s625 = scalar_lea.vmem %s0, %s624
        %p626 = pneg %p71
        %p627 = pneg %p68
        %p628 = pneg %p92
        %p629 = pneg %p89
        %p630 = pneg %p113
        %p631 = pneg %p110
        %p632 = pneg %p134
        %p633 = pneg %p131
        %p634 = pneg %p155
        %p635 = pneg %p152
        %p636 = pneg %p176
        %p637 = pneg %p173
        %p638 = pneg %p197
        %p639 = pneg %p194
        %p640 = pneg %p218
        %p641 = pneg %p215
        %p642 = pneg %p239
        %p643 = pneg %p236
        %p644 = pneg %p260
        %p645 = pneg %p257
        %p646 = pneg %p281
        %p647 = pneg %p278
        %p648 = pneg %p302
        %p649 = pneg %p299
        %p650 = pneg %p323
        %p651 = pneg %p320
        %p652 = pneg %p344
        %p653 = pneg %p341
        %p654 = pneg %p365
        %p655 = pneg %p362
        %p656 = pneg %p386
        %p657 = pneg %p383
        %p658 = pneg %p407
        %p659 = pneg %p404
        %p660 = pneg %p428
        %p661 = pneg %p425
        %p662 = pneg %p449
        %p663 = pneg %p446
        %p664 = pneg %p470
        %p665 = pneg %p467
        %p666 = pneg %p498
        %p667 = pneg %p495
        %s668 = sand.u32 %s485, 1
        %s669 = scalar_lea.sflag [#allocation3], %s668
        %s670 = sand.u32 %s485, 1
        %s671 = smul.addr %s670, 8
        %s672 = scalar_lea.vmem [#allocation2], %s671
        %p673 = pneg %p526
        %p674 = pneg %p523
        %p675 = scmp.lt.s32.totalorder %s40, 1
        %s676 = scalar_select %p675, %s40, 1
        %p677 = scmp.lt.s32.totalorder %s41, 0
        %s678 = scalar_select %p677, %s41, 0
        %s679 = smul.addr %s676, 3
        %s680 = sadd.s32 %s678, %s679
        %s681 = smul.addr %s680, 8
        %s682 = scalar_lea.vmem %s21, %s681
        %p683 = scmp.lt.s32.totalorder %s40, 1
        %s684 = scalar_select %p683, %s40, 1
        %p685 = scmp.lt.s32.totalorder %s41, 0
        %s686 = scalar_select %p685, %s41, 0
        %s687 = sadd.s32 %s686, %s684
        %s688 = smul.addr %s687, 4
        %s689 = scalar_lea.vmem %s0, %s688
        %p690 = scmp.lt.s32.totalorder %s40, 1
        %s691 = scalar_select %p690, %s40, 1
        %p692 = scmp.lt.s32.totalorder %s41, 0
        %s693 = scalar_select %p692, %s41, 0
        %s694 = smul.addr %s691, 3
        %s695 = sadd.s32 %s693, %s694
        %s696 = smul.addr %s695, 8
        %s697 = scalar_lea.vmem %s21, %s696
        %v699 = vld [vmem:[%s689] sm:$0xf]
        %v700 = vld [vmem:[%s1] sm:$0xf]
        %v701 = vld [vmem:[%s1 + $0x4] sm:$0xf]
        %v702 = vld [vmem:[%s1 + $0x8] sm:$0xf]
        %v703 = vld [vmem:[%s1 + $0xc] sm:$0xf]
        %v704 = vld [vmem:[%s2] sm:$0xff]
        %v705 = vld [vmem:[%s2 + $0x8] sm:$0xff]
        %v706 = vld [vmem:[%s2 + $0x10] sm:$0xff]
        %v707 = vld [vmem:[%s2 + $0x18] sm:$0xff]
        %709 = vset.pattern.permute.xlu0 0
        %710 = vperm.xlu0 %709, %v704
        %v711 = vpop.permute.xlu0 %710
        %714 = vset.pattern.permute.xlu0 0
        %715 = vperm.xlu0 %714, %v705
        %v716 = vpop.permute.xlu0 %715
        %719 = vset.pattern.permute.xlu0 0
        %720 = vperm.xlu0 %719, %v706
        %v721 = vpop.permute.xlu0 %720
        %724 = vset.pattern.permute.xlu0 0
        %725 = vperm.xlu0 %724, %v707
        %v726 = vpop.permute.xlu0 %725
        %v732 = vunpack.c.l.b16 %v700
        %v733 = vunpack.c.l.b16 %v701
        %v734 = vunpack.c.l.b16 %v702
        %v735 = vunpack.c.l.b16 %v703
        %v736 = vpack.c.b16 %v733, %v732
        %v737 = vpack.c.b16 %v735, %v734
        %vm738 = vcmask 64512
        %v740 = vsel %vm738, %v736, 0
        %v743 = vsel %vm738, %v737, 0
        %vm745 = vcmask 1043456
        %v747 = vsel %vm745, %v699, 0
        %749 = vmatprep.subr.bf16.mxu0 0
        %750 = vmatpush1.bf16.msra.mxu0 %v747
        %751 = vmatprep.subr.bf16.mxu0 0
        %752 = vmatpush1.bf16.msra.mxu0 0
        %753 = vmatprep.subr.bf16.mxu0 0
        %754 = vmatpush1.bf16.msra.mxu0 0
        %755 = vmatprep.subr.bf16.mxu0 0
        %756 = vmatpush1.bf16.msra.mxu0 0
        %757 = vmatprep.subr.bf16.mxu0 0
        %758 = vmatpush1.bf16.msra.mxu0 0
        %759 = vmatprep.subr.bf16.mxu0 0
        %760 = vmatpush1.bf16.msra.mxu0 0
        %761 = vmatprep.subr.bf16.mxu0 0
        %762 = vmatpush1.bf16.msra.mxu0 0
        %763 = vmatprep.subr.bf16.mxu0 0
        %764 = vmatpush1.bf16.msra.mxu0 0
        %765 = vmatprep.subr.bf16.mxu0 0
        %766 = vmatpush1.bf16.msra.mxu0 0
        %767 = vmatprep.subr.bf16.mxu0 0
        %768 = vmatpush1.bf16.msra.mxu0 0
        %769 = vmatprep.subr.bf16.mxu0 0
        %770 = vmatpush1.bf16.msra.mxu0 0
        %771 = vmatprep.subr.bf16.mxu0 0
        %772 = vmatpush1.bf16.msra.mxu0 0
        %773 = vmatprep.subr.bf16.mxu0 0
        %774 = vmatpush1.bf16.msra.mxu0 0
        %775 = vmatprep.subr.bf16.mxu0 0
        %776 = vmatpush1.bf16.msra.mxu0 0
        %777 = vmatprep.subr.bf16.mxu0 0
        %778 = vmatpush1.bf16.msra.mxu0 0
        %779 = vmatprep.subr.bf16.mxu0 0
        %780 = vmatpush1.bf16.msra.mxu0 0
        %781 = vmatprep.mubr.bf16.mxu0 0
        %782 = vmatmul.mubr.bf16.gmra.mrb[0].mxu0 %v740
        %v783 = vpop.f32.mrb[0].mxu0
        %v784 = vadd.f32 %v711, %v783
        %v785 = vpop.f32.mrb[0].mxu0
        %v786 = vpop.f32.mrb[0].mxu0
        %v787 = vadd.f32 %v716, %v786
        %v788 = vpop.f32.mrb[0].mxu0
        %789 = vmatprep.mubr.bf16.mxu0 0
        %790 = vmatmul.mubr.bf16.gmra.mrb[0].mxu0 %v743
        %v791 = vpop.f32.mrb[0].mxu0
        %v792 = vadd.f32 %v721, %v791
        %v793 = vpop.f32.mrb[0].mxu0
        %v794 = vpop.f32.mrb[0].mxu0
        %v795 = vadd.f32 %v726, %v794
        %v796 = vpop.f32.mrb[0].mxu0
        %797 = vdwg.mxu0
        %v798 = vmax.f32 %v784, 0.0
        %v799 = vmax.f32 %v787, 0.0
        %v800 = vmax.f32 %v792, 0.0
        %v801 = vmax.f32 %v795, 0.0
        %v802 = vpack.c.bf16 %v799, %v798
        %v803 = vpack.c.bf16 %v801, %v800
        %v804 = vld [vmem:[%s3] sm:$0xf]
        %v805 = vld [vmem:[%s3 + $0x4] sm:$0xf]
        %v806 = vld [vmem:[%s3 + $0x8] sm:$0xf]
        %v807 = vld [vmem:[%s3 + $0xc] sm:$0xf]
        %v808 = vld [vmem:[%s3 + $0x10] sm:$0xf]
        %v809 = vld [vmem:[%s3 + $0x14] sm:$0xf]
        %v810 = vld [vmem:[%s3 + $0x18] sm:$0xf]
        %v811 = vld [vmem:[%s3 + $0x1c] sm:$0xf]
        %v812 = vld [vmem:[%s4] sm:$0xff]
        %v813 = vld [vmem:[%s4 + $0x8] sm:$0xff]
        %v814 = vld [vmem:[%s4 + $0x10] sm:$0xff]
        %v815 = vld [vmem:[%s4 + $0x18] sm:$0xff]
        %v816 = vld [vmem:[%s4 + $0x20] sm:$0xff]
        %v817 = vld [vmem:[%s4 + $0x28] sm:$0xff]
        %v818 = vld [vmem:[%s4 + $0x30] sm:$0xff]
        %v819 = vld [vmem:[%s4 + $0x38] sm:$0xff]
        %821 = vset.pattern.permute.xlu0 0
        %822 = vperm.xlu0 %821, %v812
        %v823 = vpop.permute.xlu0 %822
        %826 = vset.pattern.permute.xlu0 0
        %827 = vperm.xlu0 %826, %v813
        %v828 = vpop.permute.xlu0 %827
        %831 = vset.pattern.permute.xlu0 0
        %832 = vperm.xlu0 %831, %v814
        %v833 = vpop.permute.xlu0 %832
        %836 = vset.pattern.permute.xlu0 0
        %837 = vperm.xlu0 %836, %v815
        %v838 = vpop.permute.xlu0 %837
        %841 = vset.pattern.permute.xlu0 0
        %842 = vperm.xlu0 %841, %v816
        %v843 = vpop.permute.xlu0 %842
        %846 = vset.pattern.permute.xlu0 0
        %847 = vperm.xlu0 %846, %v817
        %v848 = vpop.permute.xlu0 %847
        %851 = vset.pattern.permute.xlu0 0
        %852 = vperm.xlu0 %851, %v818
        %v853 = vpop.permute.xlu0 %852
        %856 = vset.pattern.permute.xlu0 0
        %857 = vperm.xlu0 %856, %v819
        %v858 = vpop.permute.xlu0 %857
        %v868 = vunpack.c.l.b16 %v804
        %v869 = vunpack.c.l.b16 %v805
        %v870 = vunpack.c.l.b16 %v806
        %v871 = vunpack.c.l.b16 %v807
        %v872 = vunpack.c.l.b16 %v808
        %v873 = vunpack.c.l.b16 %v809
        %v874 = vunpack.c.l.b16 %v810
        %v875 = vunpack.c.l.b16 %v811
        %v876 = vpack.c.b16 %v869, %v868
        %v877 = vpack.c.b16 %v871, %v870
        %v878 = vpack.c.b16 %v873, %v872
        %v879 = vpack.c.b16 %v875, %v874
        %vm880 = vcmask 261120
        %v882 = vsel %vm880, %v876, 0
        %v885 = vsel %vm880, %v877, 0
        %v888 = vsel %vm880, %v878, 0
        %v891 = vsel %vm880, %v879, 0
        %893 = vmatprep.subr.bf16.mxu0 0
        %894 = vmatpush1.bf16.msra.mxu0 %v802
        %895 = vmatprep.subr.bf16.mxu0 0
        %896 = vmatpush1.bf16.msra.mxu0 %v803
        %897 = vmatprep.subr.bf16.mxu0 0
        %898 = vmatpush1.bf16.msra.mxu0 0
        %899 = vmatprep.subr.bf16.mxu0 0
        %900 = vmatpush1.bf16.msra.mxu0 0
        %901 = vmatprep.subr.bf16.mxu0 0
        %902 = vmatpush1.bf16.msra.mxu0 0
        %903 = vmatprep.subr.bf16.mxu0 0
        %904 = vmatpush1.bf16.msra.mxu0 0
        %905 = vmatprep.subr.bf16.mxu0 0
        %906 = vmatpush1.bf16.msra.mxu0 0
        %907 = vmatprep.subr.bf16.mxu0 0
        %908 = vmatpush1.bf16.msra.mxu0 0
        %909 = vmatprep.subr.bf16.mxu0 0
        %910 = vmatpush1.bf16.msra.mxu0 0
        %911 = vmatprep.subr.bf16.mxu0 0
        %912 = vmatpush1.bf16.msra.mxu0 0
        %913 = vmatprep.subr.bf16.mxu0 0
        %914 = vmatpush1.bf16.msra.mxu0 0
        %915 = vmatprep.subr.bf16.mxu0 0
        %916 = vmatpush1.bf16.msra.mxu0 0
        %917 = vmatprep.subr.bf16.mxu0 0
        %918 = vmatpush1.bf16.msra.mxu0 0
        %919 = vmatprep.subr.bf16.mxu0 0
        %920 = vmatpush1.bf16.msra.mxu0 0
        %921 = vmatprep.subr.bf16.mxu0 0
        %922 = vmatpush1.bf16.msra.mxu0 0
        %923 = vmatprep.subr.bf16.mxu0 0
        %924 = vmatpush1.bf16.msra.mxu0 0
        %925 = vmatprep.mubr.bf16.mxu0 0
        %926 = vmatmul.mubr.bf16.gmra.mrb[0].mxu0 %v882
        %v927 = vpop.f32.mrb[0].mxu0
        %v928 = vadd.f32 %v823, %v927
        %v929 = vpop.f32.mrb[0].mxu0
        %v930 = vpop.f32.mrb[0].mxu0
        %v931 = vadd.f32 %v828, %v930
        %v932 = vpop.f32.mrb[0].mxu0
        %933 = vmatprep.mubr.bf16.mxu0 0
        %934 = vmatmul.mubr.bf16.gmra.mrb[0].mxu0 %v885
        %v935 = vpop.f32.mrb[0].mxu0
        %v936 = vadd.f32 %v833, %v935
        %v937 = vpop.f32.mrb[0].mxu0
        %v938 = vpop.f32.mrb[0].mxu0
        %v939 = vadd.f32 %v838, %v938
        %v940 = vpop.f32.mrb[0].mxu0
        %941 = vmatprep.mubr.bf16.mxu0 0
        %942 = vmatmul.mubr.bf16.gmra.mrb[0].mxu0 %v888
        %v943 = vpop.f32.mrb[0].mxu0
        %v944 = vadd.f32 %v843, %v943
        %v945 = vpop.f32.mrb[0].mxu0
        %v946 = vpop.f32.mrb[0].mxu0
        %v947 = vadd.f32 %v848, %v946
        %v948 = vpop.f32.mrb[0].mxu0
        %949 = vmatprep.mubr.bf16.mxu0 0
        %950 = vmatmul.mubr.bf16.gmra.mrb[0].mxu0 %v891
        %v951 = vpop.f32.mrb[0].mxu0
        %v952 = vadd.f32 %v853, %v951
        %v953 = vpop.f32.mrb[0].mxu0
        %v954 = vpop.f32.mrb[0].mxu0
        %v955 = vadd.f32 %v858, %v954
        %v956 = vpop.f32.mrb[0].mxu0
        %957 = vdwg.mxu0
        %v958 = vmax.f32 %v928, 0.0
        %v959 = vmax.f32 %v931, 0.0
        %v960 = vmax.f32 %v936, 0.0
        %v961 = vmax.f32 %v939, 0.0
        %v962 = vmax.f32 %v944, 0.0
        %v963 = vmax.f32 %v947, 0.0
        %v964 = vmax.f32 %v952, 0.0
        %v965 = vmax.f32 %v955, 0.0
        %v966 = vpack.c.bf16 %v959, %v958
        %v967 = vpack.c.bf16 %v961, %v960
        %v968 = vpack.c.bf16 %v963, %v962
        %v969 = vpack.c.bf16 %v965, %v964
        %v970 = vld [vmem:[%s5] sm:$0xf]
        %v971 = vld [vmem:[%s5 + $0x4] sm:$0xf]
        %v972 = vld [vmem:[%s5 + $0x8] sm:$0xf]
        %v973 = vld [vmem:[%s5 + $0xc] sm:$0xf]
        %v974 = vld [vmem:[%s5 + $0x10] sm:$0xf]
        %v975 = vld [vmem:[%s5 + $0x14] sm:$0xf]
        %v976 = vld [vmem:[%s5 + $0x18] sm:$0xf]
        %v977 = vld [vmem:[%s5 + $0x1c] sm:$0xf]
        %v978 = vld [vmem:[%s5 + $0x20] sm:$0xf]
        %v979 = vld [vmem:[%s5 + $0x24] sm:$0xf]
        %v980 = vld [vmem:[%s5 + $0x28] sm:$0xf]
        %v981 = vld [vmem:[%s5 + $0x2c] sm:$0xf]
        %v982 = vld [vmem:[%s5 + $0x30] sm:$0xf]
        %v983 = vld [vmem:[%s5 + $0x34] sm:$0xf]
        %v984 = vld [vmem:[%s5 + $0x38] sm:$0xf]
        %v985 = vld [vmem:[%s5 + $0x3c] sm:$0xf]
        %v986 = vld [vmem:[%s5 + $0x40] sm:$0xf]
        %v987 = vld [vmem:[%s5 + $0x44] sm:$0xf]
        %v988 = vld [vmem:[%s5 + $0x48] sm:$0xf]
        %v989 = vld [vmem:[%s5 + $0x4c] sm:$0xf]
        %v990 = vld [vmem:[%s5 + $0x50] sm:$0xf]
        %v991 = vld [vmem:[%s5 + $0x54] sm:$0xf]
        %v992 = vld [vmem:[%s5 + $0x58] sm:$0xf]
        %v993 = vld [vmem:[%s5 + $0x5c] sm:$0xf]
        %v994 = vld [vmem:[%s6] sm:$0xff]
        %v995 = vld [vmem:[%s6 + $0x8] sm:$0xff]
        %v996 = vld [vmem:[%s6 + $0x10] sm:$0xff]
        %v997 = vld [vmem:[%s6 + $0x18] sm:$0xff]
        %v998 = vld [vmem:[%s6 + $0x20] sm:$0xff]
        %v999 = vld [vmem:[%s6 + $0x28] sm:$0xff]
        %v1000 = vld [vmem:[%s6 + $0x30] sm:$0xff]
        %v1001 = vld [vmem:[%s6 + $0x38] sm:$0xff]
        %v1002 = vld [vmem:[%s6 + $0x40] sm:$0xff]
        %v1003 = vld [vmem:[%s6 + $0x48] sm:$0xff]
        %v1004 = vld [vmem:[%s6 + $0x50] sm:$0xff]
        %v1005 = vld [vmem:[%s6 + $0x58] sm:$0xff]
        %v1006 = vld [vmem:[%s6 + $0x60] sm:$0xff]
        %v1007 = vld [vmem:[%s6 + $0x68] sm:$0xff]
        %v1008 = vld [vmem:[%s6 + $0x70] sm:$0xff]
        %v1009 = vld [vmem:[%s6 + $0x78] sm:$0xff]
        %v1010 = vld [vmem:[%s6 + $0x80] sm:$0xff]
        %v1011 = vld [vmem:[%s6 + $0x88] sm:$0xff]
        %v1012 = vld [vmem:[%s6 + $0x90] sm:$0xff]
        %v1013 = vld [vmem:[%s6 + $0x98] sm:$0xff]
        %v1014 = vld [vmem:[%s6 + $0xa0] sm:$0xff]
        %v1015 = vld [vmem:[%s6 + $0xa8] sm:$0xff]
        %v1016 = vld [vmem:[%s6 + $0xb0] sm:$0xff]
        %v1017 = vld [vmem:[%s6 + $0xb8] sm:$0xff]
        %1019 = vset.pattern.permute.xlu0 0
        %1020 = vperm.xlu0 %1019, %v994
        %v1021 = vpop.permute.xlu0 %1020
        %1024 = vset.pattern.permute.xlu0 0
        %1025 = vperm.xlu0 %1024, %v995
        %v1026 = vpop.permute.xlu0 %1025
        %1029 = vset.pattern.permute.xlu0 0
        %1030 = vperm.xlu0 %1029, %v996
        %v1031 = vpop.permute.xlu0 %1030
        %1034 = vset.pattern.permute.xlu0 0
        %1035 = vperm.xlu0 %1034, %v997
        %v1036 = vpop.permute.xlu0 %1035
        %1039 = vset.pattern.permute.xlu0 0
        %1040 = vperm.xlu0 %1039, %v998
        %v1041 = vpop.permute.xlu0 %1040
        %1044 = vset.pattern.permute.xlu0 0
        %1045 = vperm.xlu0 %1044, %v999
        %v1046 = vpop.permute.xlu0 %1045
        %1049 = vset.pattern.permute.xlu0 0
        %1050 = vperm.xlu0 %1049, %v1000
        %v1051 = vpop.permute.xlu0 %1050
        %1054 = vset.pattern.permute.xlu0 0
        %1055 = vperm.xlu0 %1054, %v1001
        %v1056 = vpop.permute.xlu0 %1055
        %1059 = vset.pattern.permute.xlu0 0
        %1060 = vperm.xlu0 %1059, %v1002
        %v1061 = vpop.permute.xlu0 %1060
        %1064 = vset.pattern.permute.xlu0 0
        %1065 = vperm.xlu0 %1064, %v1003
        %v1066 = vpop.permute.xlu0 %1065
        %1069 = vset.pattern.permute.xlu0 0
        %1070 = vperm.xlu0 %1069, %v1004
        %v1071 = vpop.permute.xlu0 %1070
        %1074 = vset.pattern.permute.xlu0 0
        %1075 = vperm.xlu0 %1074, %v1005
        %v1076 = vpop.permute.xlu0 %1075
        %1079 = vset.pattern.permute.xlu0 0
        %1080 = vperm.xlu0 %1079, %v1006
        %v1081 = vpop.permute.xlu0 %1080
        %1084 = vset.pattern.permute.xlu0 0
        %1085 = vperm.xlu0 %1084, %v1007
        %v1086 = vpop.permute.xlu0 %1085
        %1089 = vset.pattern.permute.xlu0 0
        %1090 = vperm.xlu0 %1089, %v1008
        %v1091 = vpop.permute.xlu0 %1090
        %1094 = vset.pattern.permute.xlu0 0
        %1095 = vperm.xlu0 %1094, %v1009
        %v1096 = vpop.permute.xlu0 %1095
        %1099 = vset.pattern.permute.xlu0 0
        %1100 = vperm.xlu0 %1099, %v1010
        %v1101 = vpop.permute.xlu0 %1100
        %1104 = vset.pattern.permute.xlu0 0
        %1105 = vperm.xlu0 %1104, %v1011
        %v1106 = vpop.permute.xlu0 %1105
        %1109 = vset.pattern.permute.xlu0 0
        %1110 = vperm.xlu0 %1109, %v1012
        %v1111 = vpop.permute.xlu0 %1110
        %1114 = vset.pattern.permute.xlu0 0
        %1115 = vperm.xlu0 %1114, %v1013
        %v1116 = vpop.permute.xlu0 %1115
        %1119 = vset.pattern.permute.xlu0 0
        %1120 = vperm.xlu0 %1119, %v1014
        %v1121 = vpop.permute.xlu0 %1120
        %1124 = vset.pattern.permute.xlu0 0
        %1125 = vperm.xlu0 %1124, %v1015
        %v1126 = vpop.permute.xlu0 %1125
        %1129 = vset.pattern.permute.xlu0 0
        %1130 = vperm.xlu0 %1129, %v1016
        %v1131 = vpop.permute.xlu0 %1130
        %1134 = vset.pattern.permute.xlu0 0
        %1135 = vperm.xlu0 %1134, %v1017
        %v1136 = vpop.permute.xlu0 %1135
        %v1162 = vunpack.c.l.b16 %v970
        %v1163 = vunpack.c.l.b16 %v971
        %v1164 = vunpack.c.l.b16 %v972
        %v1165 = vunpack.c.l.b16 %v973
        %v1166 = vunpack.c.l.b16 %v974
        %v1167 = vunpack.c.l.b16 %v975
        %v1168 = vunpack.c.l.b16 %v976
        %v1169 = vunpack.c.l.b16 %v977
        %v1170 = vunpack.c.l.b16 %v978
        %v1171 = vunpack.c.l.b16 %v979
        %v1172 = vunpack.c.l.b16 %v980
        %v1173 = vunpack.c.l.b16 %v981
        %v1174 = vunpack.c.l.b16 %v982
        %v1175 = vunpack.c.l.b16 %v983
        %v1176 = vunpack.c.l.b16 %v984
        %v1177 = vunpack.c.l.b16 %v985
        %v1178 = vunpack.c.l.b16 %v986
        %v1179 = vunpack.c.l.b16 %v987
        %v1180 = vunpack.c.l.b16 %v988
        %v1181 = vunpack.c.l.b16 %v989
        %v1182 = vunpack.c.l.b16 %v990
        %v1183 = vunpack.c.l.b16 %v991
        %v1184 = vunpack.c.l.b16 %v992
        %v1185 = vunpack.c.l.b16 %v993
        %v1186 = vpack.c.b16 %v1163, %v1162
        %v1187 = vpack.c.b16 %v1165, %v1164
        %v1188 = vpack.c.b16 %v1167, %v1166
        %v1189 = vpack.c.b16 %v1169, %v1168
        %v1190 = vpack.c.b16 %v1171, %v1170
        %v1191 = vpack.c.b16 %v1173, %v1172
        %v1192 = vpack.c.b16 %v1175, %v1174
        %v1193 = vpack.c.b16 %v1177, %v1176
        %v1194 = vpack.c.b16 %v1179, %v1178
        %v1195 = vpack.c.b16 %v1181, %v1180
        %v1196 = vpack.c.b16 %v1183, %v1182
        %v1197 = vpack.c.b16 %v1185, %v1184
        %vm1198 = vcmask 523264
        %v1200 = vsel %vm1198, %v1186, 0
        %v1203 = vsel %vm1198, %v1187, 0
        %v1206 = vsel %vm1198, %v1188, 0
        %v1209 = vsel %vm1198, %v1189, 0
        %v1212 = vsel %vm1198, %v1190, 0
        %v1215 = vsel %vm1198, %v1191, 0
        %v1218 = vsel %vm1198, %v1192, 0
        %v1221 = vsel %vm1198, %v1193, 0
        %v1224 = vsel %vm1198, %v1194, 0
        %v1227 = vsel %vm1198, %v1195, 0
        %v1230 = vsel %vm1198, %v1196, 0
        %v1233 = vsel %vm1198, %v1197, 0
        %1235 = vmatprep.subr.bf16.mxu0 0
        %1236 = vmatpush1.bf16.msra.mxu0 %v966
        %1237 = vmatprep.subr.bf16.mxu0 0
        %1238 = vmatpush1.bf16.msra.mxu0 %v967
        %1239 = vmatprep.subr.bf16.mxu0 0
        %1240 = vmatpush1.bf16.msra.mxu0 %v968
        %1241 = vmatprep.subr.bf16.mxu0 0
        %1242 = vmatpush1.bf16.msra.mxu0 %v969
        %1243 = vmatprep.subr.bf16.mxu0 0
        %1244 = vmatpush1.bf16.msra.mxu0 0
        %1245 = vmatprep.subr.bf16.mxu0 0
        %1246 = vmatpush1.bf16.msra.mxu0 0
        %1247 = vmatprep.subr.bf16.mxu0 0
        %1248 = vmatpush1.bf16.msra.mxu0 0
        %1249 = vmatprep.subr.bf16.mxu0 0
        %1250 = vmatpush1.bf16.msra.mxu0 0
        %1251 = vmatprep.subr.bf16.mxu0 0
        %1252 = vmatpush1.bf16.msra.mxu0 0
        %1253 = vmatprep.subr.bf16.mxu0 0
        %1254 = vmatpush1.bf16.msra.mxu0 0
        %1255 = vmatprep.subr.bf16.mxu0 0
        %1256 = vmatpush1.bf16.msra.mxu0 0
        %1257 = vmatprep.subr.bf16.mxu0 0
        %1258 = vmatpush1.bf16.msra.mxu0 0
        %1259 = vmatprep.subr.bf16.mxu0 0
        %1260 = vmatpush1.bf16.msra.mxu0 0
        %1261 = vmatprep.subr.bf16.mxu0 0
        %1262 = vmatpush1.bf16.msra.mxu0 0
        %1263 = vmatprep.subr.bf16.mxu0 0
        %1264 = vmatpush1.bf16.msra.mxu0 0
        %1265 = vmatprep.subr.bf16.mxu0 0
        %1266 = vmatpush1.bf16.msra.mxu0 0
        %1267 = vmatprep.mubr.bf16.mxu0 0
        %1268 = vmatmul.mubr.bf16.gmra.mrb[0].mxu0 %v1200
        %v1269 = vpop.f32.mrb[0].mxu0
        %v1270 = vadd.f32 %v1021, %v1269
        %v1271 = vpop.f32.mrb[0].mxu0
        %v1272 = vpop.f32.mrb[0].mxu0
        %v1273 = vadd.f32 %v1026, %v1272
        %v1274 = vpop.f32.mrb[0].mxu0
        %1275 = vmatprep.mubr.bf16.mxu0 0
        %1276 = vmatmul.mubr.bf16.gmra.mrb[0].mxu0 %v1203
        %v1277 = vpop.f32.mrb[0].mxu0
        %v1278 = vadd.f32 %v1031, %v1277
        %v1279 = vpop.f32.mrb[0].mxu0
        %v1280 = vpop.f32.mrb[0].mxu0
        %v1281 = vadd.f32 %v1036, %v1280
        %v1282 = vpop.f32.mrb[0].mxu0
        %1283 = vmatprep.mubr.bf16.mxu0 0
        %1284 = vmatmul.mubr.bf16.gmra.mrb[0].mxu0 %v1206
        %v1285 = vpop.f32.mrb[0].mxu0
        %v1286 = vadd.f32 %v1041, %v1285
        %v1287 = vpop.f32.mrb[0].mxu0
        %v1288 = vpop.f32.mrb[0].mxu0
        %v1289 = vadd.f32 %v1046, %v1288
        %v1290 = vpop.f32.mrb[0].mxu0
        %1291 = vmatprep.mubr.bf16.mxu0 0
        %1292 = vmatmul.mubr.bf16.gmra.mrb[0].mxu0 %v1209
        %v1293 = vpop.f32.mrb[0].mxu0
        %v1294 = vadd.f32 %v1051, %v1293
        %v1295 = vpop.f32.mrb[0].mxu0
        %v1296 = vpop.f32.mrb[0].mxu0
        %v1297 = vadd.f32 %v1056, %v1296
        %v1298 = vpop.f32.mrb[0].mxu0
        %1299 = vmatprep.mubr.bf16.mxu0 0
        %1300 = vmatmul.mubr.bf16.gmra.mrb[0].mxu0 %v1212
        %v1301 = vpop.f32.mrb[0].mxu0
        %v1302 = vadd.f32 %v1061, %v1301
        %v1303 = vpop.f32.mrb[0].mxu0
        %v1304 = vpop.f32.mrb[0].mxu0
        %v1305 = vadd.f32 %v1066, %v1304
        %v1306 = vpop.f32.mrb[0].mxu0
        %1307 = vmatprep.mubr.bf16.mxu0 0
        %1308 = vmatmul.mubr.bf16.gmra.mrb[0].mxu0 %v1215
        %v1309 = vpop.f32.mrb[0].mxu0
        %v1310 = vadd.f32 %v1071, %v1309
        %v1311 = vpop.f32.mrb[0].mxu0
        %v1312 = vpop.f32.mrb[0].mxu0
        %v1313 = vadd.f32 %v1076, %v1312
        %v1314 = vpop.f32.mrb[0].mxu0
        %1315 = vmatprep.mubr.bf16.mxu0 0
        %1316 = vmatmul.mubr.bf16.gmra.mrb[0].mxu0 %v1218
        %v1317 = vpop.f32.mrb[0].mxu0
        %v1318 = vadd.f32 %v1081, %v1317
        %v1319 = vpop.f32.mrb[0].mxu0
        %v1320 = vpop.f32.mrb[0].mxu0
        %v1321 = vadd.f32 %v1086, %v1320
        %v1322 = vpop.f32.mrb[0].mxu0
        %1323 = vmatprep.mubr.bf16.mxu0 0
        %1324 = vmatmul.mubr.bf16.gmra.mrb[0].mxu0 %v1221
        %v1325 = vpop.f32.mrb[0].mxu0
        %v1326 = vadd.f32 %v1091, %v1325
        %v1327 = vpop.f32.mrb[0].mxu0
        %v1328 = vpop.f32.mrb[0].mxu0
        %v1329 = vadd.f32 %v1096, %v1328
        %v1330 = vpop.f32.mrb[0].mxu0
        %1331 = vmatprep.mubr.bf16.mxu0 0
        %1332 = vmatmul.mubr.bf16.gmra.mrb[0].mxu0 %v1224
        %v1333 = vpop.f32.mrb[0].mxu0
        %v1334 = vadd.f32 %v1101, %v1333
        %v1335 = vpop.f32.mrb[0].mxu0
        %v1336 = vpop.f32.mrb[0].mxu0
        %v1337 = vadd.f32 %v1106, %v1336
        %v1338 = vpop.f32.mrb[0].mxu0
        %1339 = vmatprep.mubr.bf16.mxu0 0
        %1340 = vmatmul.mubr.bf16.gmra.mrb[0].mxu0 %v1227
        %v1341 = vpop.f32.mrb[0].mxu0
        %v1342 = vadd.f32 %v1111, %v1341
        %v1343 = vpop.f32.mrb[0].mxu0
        %v1344 = vpop.f32.mrb[0].mxu0
        %v1345 = vadd.f32 %v1116, %v1344
        %v1346 = vpop.f32.mrb[0].mxu0
        %1347 = vmatprep.mubr.bf16.mxu0 0
        %1348 = vmatmul.mubr.bf16.gmra.mrb[0].mxu0 %v1230
        %v1349 = vpop.f32.mrb[0].mxu0
        %v1350 = vadd.f32 %v1121, %v1349
        %v1351 = vpop.f32.mrb[0].mxu0
        %v1352 = vpop.f32.mrb[0].mxu0
        %v1353 = vadd.f32 %v1126, %v1352
        %v1354 = vpop.f32.mrb[0].mxu0
        %1355 = vmatprep.mubr.bf16.mxu0 0
        %1356 = vmatmul.mubr.bf16.gmra.mrb[0].mxu0 %v1233
        %v1357 = vpop.f32.mrb[0].mxu0
        %v1358 = vadd.f32 %v1131, %v1357
        %v1359 = vpop.f32.mrb[0].mxu0
        %v1360 = vpop.f32.mrb[0].mxu0
        %v1361 = vadd.f32 %v1136, %v1360
        %v1362 = vpop.f32.mrb[0].mxu0
        %1363 = vdwg.mxu0
        %v1364 = vmax.f32 %v1270, 0.0
        %v1365 = vmax.f32 %v1273, 0.0
        %v1366 = vmax.f32 %v1278, 0.0
        %v1367 = vmax.f32 %v1281, 0.0
        %v1368 = vmax.f32 %v1286, 0.0
        %v1369 = vmax.f32 %v1289, 0.0
        %v1370 = vmax.f32 %v1294, 0.0
        %v1371 = vmax.f32 %v1297, 0.0
        %v1372 = vmax.f32 %v1302, 0.0
        %v1373 = vmax.f32 %v1305, 0.0
        %v1374 = vmax.f32 %v1310, 0.0
        %v1375 = vmax.f32 %v1313, 0.0
        %v1376 = vmax.f32 %v1318, 0.0
        %v1377 = vmax.f32 %v1321, 0.0
        %v1378 = vmax.f32 %v1326, 0.0
        %v1379 = vmax.f32 %v1329, 0.0
        %v1380 = vmax.f32 %v1334, 0.0
        %v1381 = vmax.f32 %v1337, 0.0
        %v1382 = vmax.f32 %v1342, 0.0
        %v1383 = vmax.f32 %v1345, 0.0
        %v1384 = vmax.f32 %v1350, 0.0
        %v1385 = vmax.f32 %v1353, 0.0
        %v1386 = vmax.f32 %v1358, 0.0
        %v1387 = vmax.f32 %v1361, 0.0
        %v1388 = vpack.c.bf16 %v1365, %v1364
        %v1389 = vpack.c.bf16 %v1367, %v1366
        %v1390 = vpack.c.bf16 %v1369, %v1368
        %v1391 = vpack.c.bf16 %v1371, %v1370
        %v1392 = vpack.c.bf16 %v1373, %v1372
        %v1393 = vpack.c.bf16 %v1375, %v1374
        %v1394 = vpack.c.bf16 %v1377, %v1376
        %v1395 = vpack.c.bf16 %v1379, %v1378
        %v1396 = vpack.c.bf16 %v1381, %v1380
        %v1397 = vpack.c.bf16 %v1383, %v1382
        %v1398 = vpack.c.bf16 %v1385, %v1384
        %v1399 = vpack.c.bf16 %v1387, %v1386
        %v1400 = vld [vmem:[%s7] sm:$0xff]
        %v1401 = vld [vmem:[%s7 + $0x8] sm:$0xff]
        %v1402 = vld [vmem:[%s7 + $0x10] sm:$0x11]
        %v1403 = vld [vmem:[%s8] sm:$0xff]
        %v1404 = vld [vmem:[%s8 + $0x8] sm:$0xff]
        %v1405 = vld [vmem:[%s8 + $0x10] sm:$0x3]
        %1407 = vset.pattern.permute.xlu0 0
        %1408 = vperm.xlu0 %1407, %v1403
        %v1409 = vpop.permute.xlu0 %1408
        %1412 = vset.pattern.permute.xlu0 0
        %1413 = vperm.xlu0 %1412, %v1404
        %v1414 = vpop.permute.xlu0 %1413
        %1417 = vset.pattern.permute.xlu0 0
        %1418 = vperm.xlu0 %1417, %v1405
        %v1419 = vpop.permute.xlu0 %1418
        %v1424 = vunpack.c.l.b16 %v1400
        %v1425 = vunpack.c.h.b16 %v1400
        %v1426 = vunpack.c.l.b16 %v1401
        %v1427 = vunpack.c.h.b16 %v1401
        %v1428 = vunpack.c.l.b16 %v1402
        %v1429 = vunpack.c.h.b16 %v1402
        %v1430 = vpack.c.b16 %v1426, %v1424
        %v1431 = vpack.c.b16 %v1427, %v1425
        %v1432 = vpack.c.b16 %v1428, %v1428
        %v1433 = vpack.c.b16 %v1429, %v1429
        %v1437 = vsel %vm1198, %v1431, 0
        %v1440 = vsel %vm1198, %v1433, 0
        %1442 = vmatprep.subr.bf16.mxu0 0
        %1443 = vmatpush1.bf16.msra.mxu0 %v1388
        %1444 = vmatprep.subr.bf16.mxu0 0
        %1445 = vmatpush1.bf16.msra.mxu0 %v1389
        %1446 = vmatprep.subr.bf16.mxu0 0
        %1447 = vmatpush1.bf16.msra.mxu0 %v1390
        %1448 = vmatprep.subr.bf16.mxu0 0
        %1449 = vmatpush1.bf16.msra.mxu0 %v1391
        %1450 = vmatprep.subr.bf16.mxu0 0
        %1451 = vmatpush1.bf16.msra.mxu0 %v1392
        %1452 = vmatprep.subr.bf16.mxu0 0
        %1453 = vmatpush1.bf16.msra.mxu0 %v1393
        %1454 = vmatprep.subr.bf16.mxu0 0
        %1455 = vmatpush1.bf16.msra.mxu0 %v1394
        %1456 = vmatprep.subr.bf16.mxu0 0
        %1457 = vmatpush1.bf16.msra.mxu0 %v1395
        %1458 = vmatprep.subr.bf16.mxu0 0
        %1459 = vmatpush1.bf16.msra.mxu0 %v1396
        %1460 = vmatprep.subr.bf16.mxu0 0
        %1461 = vmatpush1.bf16.msra.mxu0 %v1397
        %1462 = vmatprep.subr.bf16.mxu0 0
        %1463 = vmatpush1.bf16.msra.mxu0 %v1398
        %1464 = vmatprep.subr.bf16.mxu0 0
        %1465 = vmatpush1.bf16.msra.mxu0 %v1399
        %1466 = vmatprep.subr.bf16.mxu0 0
        %1467 = vmatpush1.bf16.msra.mxu0 0
        %1468 = vmatprep.subr.bf16.mxu0 0
        %1469 = vmatpush1.bf16.msra.mxu0 0
        %1470 = vmatprep.subr.bf16.mxu0 0
        %1471 = vmatpush1.bf16.msra.mxu0 0
        %1472 = vmatprep.subr.bf16.mxu0 0
        %1473 = vmatpush1.bf16.msra.mxu0 0
        %1474 = vmatprep.mubr.bf16.mxu0 %v1437
        %1475 = vmatmul.mubr.bf16.gmra.mrb[0].mxu0 %v1430
        %v1476 = vpop.f32.mrb[0].mxu0
        %v1477 = vadd.f32 %v1409, %v1476
        %v1478 = vpop.f32.mrb[0].mxu0
        %v1479 = vpop.f32.mrb[0].mxu0
        %v1480 = vadd.f32 %v1414, %v1479
        %v1481 = vpop.f32.mrb[0].mxu0
        %1482 = vmatprep.mubr.bf16.mxu0 %v1440
        %1483 = vmatmul.mubr.bf16.gmra.mrb[0].mxu0 %v1432
        %v1484 = vpop.f32.mrb[0].mxu0
        %v1485 = vadd.f32 %v1419, %v1484
        %v1486 = vpop.f32.mrb[0].mxu0
        %v1487 = vpop.f32.mrb[0].mxu0
        %v1488 = vpop.f32.mrb[0].mxu0
        %1489 = vdwg.mxu0
        %v1490 = vmax.f32 %v1477, 0.0
        %v1491 = vmax.f32 %v1480, 0.0
        %v1492 = vmax.f32 %v1485, 0.0
        %v1493 = vpack.c.bf16 %v1491, %v1490
        %v1494 = vpack.c.bf16 %v1492, %v1492
        %v1495 = vld [vmem:[%s9] sm:$0xf]
        %v1496 = vld [vmem:[%s9 + $0x4] sm:$0xf]
        %v1497 = vld [vmem:[%s9 + $0x8] sm:$0xf]
        %v1498 = vld [vmem:[%s9 + $0xc] sm:$0xf]
        %v1499 = vld [vmem:[%s9 + $0x10] sm:$0xf]
        %v1500 = vld [vmem:[%s9 + $0x14] sm:$0xf]
        %v1501 = vld [vmem:[%s9 + $0x18] sm:$0xf]
        %v1502 = vld [vmem:[%s9 + $0x1c] sm:$0xf]
        %v1503 = vld [vmem:[%s9 + $0x20] sm:$0xf]
        %v1504 = vld [vmem:[%s9 + $0x24] sm:$0xf]
        %v1505 = vld [vmem:[%s9 + $0x28] sm:$0xf]
        %v1506 = vld [vmem:[%s9 + $0x2c] sm:$0xf]
        %v1507 = vld [vmem:[%s9 + $0x30] sm:$0xf]
        %v1508 = vld [vmem:[%s9 + $0x34] sm:$0xf]
        %v1509 = vld [vmem:[%s9 + $0x38] sm:$0xf]
        %v1510 = vld [vmem:[%s9 + $0x3c] sm:$0xf]
        %v1511 = vld [vmem:[%s10] sm:$0xf]
        %v1512 = vld [vmem:[%s10 + $0x4] sm:$0xf]
        %v1513 = vld [vmem:[%s10 + $0x8] sm:$0xf]
        %v1514 = vld [vmem:[%s10 + $0xc] sm:$0xf]
        %v1515 = vld [vmem:[%s10 + $0x10] sm:$0xf]
        %v1516 = vld [vmem:[%s10 + $0x14] sm:$0xf]
        %v1517 = vld [vmem:[%s10 + $0x18] sm:$0xf]
        %v1518 = vld [vmem:[%s10 + $0x1c] sm:$0xf]
        %v1519 = vld [vmem:[%s10 + $0x20] sm:$0xf]
        %v1520 = vld [vmem:[%s10 + $0x24] sm:$0xf]
        %v1521 = vld [vmem:[%s10 + $0x28] sm:$0xf]
        %v1522 = vld [vmem:[%s10 + $0x2c] sm:$0xf]
        %v1523 = vld [vmem:[%s10 + $0x30] sm:$0xf]
        %v1524 = vld [vmem:[%s10 + $0x34] sm:$0xf]
        %v1525 = vld [vmem:[%s10 + $0x38] sm:$0xf]
        %v1526 = vld [vmem:[%s10 + $0x3c] sm:$0xf]
        %v1543 = vunpack.c.l.b16 %v1511
        %v1544 = vunpack.c.l.b16 %v1512
        %v1545 = vunpack.c.l.b16 %v1513
        %v1546 = vunpack.c.l.b16 %v1514
        %v1547 = vunpack.c.l.b16 %v1515
        %v1548 = vunpack.c.l.b16 %v1516
        %v1549 = vunpack.c.l.b16 %v1517
        %v1550 = vunpack.c.l.b16 %v1518
        %v1551 = vunpack.c.l.b16 %v1519
        %v1552 = vunpack.c.l.b16 %v1520
        %v1553 = vunpack.c.l.b16 %v1521
        %v1554 = vunpack.c.l.b16 %v1522
        %v1555 = vunpack.c.l.b16 %v1523
        %v1556 = vunpack.c.l.b16 %v1524
        %v1557 = vunpack.c.l.b16 %v1525
        %v1558 = vunpack.c.l.b16 %v1526
        %v1559 = vpack.c.b16 %v1544, %v1543
        %v1560 = vpack.c.b16 %v1546, %v1545
        %v1561 = vpack.c.b16 %v1548, %v1547
        %v1562 = vpack.c.b16 %v1550, %v1549
        %v1563 = vpack.c.b16 %v1552, %v1551
        %v1564 = vpack.c.b16 %v1554, %v1553
        %v1565 = vpack.c.b16 %v1556, %v1555
        %v1566 = vpack.c.b16 %v1558, %v1557
        %vm1567 = vcmask 146432
        %v1569 = vsel %vm1567, %v1559, 0
        %v1572 = vsel %vm1567, %v1560, 0
        %v1575 = vsel %vm1567, %v1561, 0
        %v1578 = vsel %vm1567, %v1562, 0
        %v1581 = vsel %vm1567, %v1563, 0
        %v1584 = vsel %vm1567, %v1564, 0
        %v1587 = vsel %vm1567, %v1565, 0
        %v1590 = vsel %vm1567, %v1566, 0
        %vm1592 = vcmask 1040384
        %v1594 = vsel %vm1592, %v1494, 0
        %1596 = vmatprep.subr.bf16.mxu0 0
        %1597 = vmatpush1.bf16.msra.mxu0 %v1493
        %1598 = vmatprep.subr.bf16.mxu0 0
        %1599 = vmatpush1.bf16.msra.mxu0 %v1594
        %1600 = vmatprep.subr.bf16.mxu0 0
        %1601 = vmatpush1.bf16.msra.mxu0 0
        %1602 = vmatprep.subr.bf16.mxu0 0
        %1603 = vmatpush1.bf16.msra.mxu0 0
        %1604 = vmatprep.subr.bf16.mxu0 0
        %1605 = vmatpush1.bf16.msra.mxu0 0
        %1606 = vmatprep.subr.bf16.mxu0 0
        %1607 = vmatpush1.bf16.msra.mxu0 0
        %1608 = vmatprep.subr.bf16.mxu0 0
        %1609 = vmatpush1.bf16.msra.mxu0 0
        %1610 = vmatprep.subr.bf16.mxu0 0
        %1611 = vmatpush1.bf16.msra.mxu0 0
        %1612 = vmatprep.subr.bf16.mxu0 0
        %1613 = vmatpush1.bf16.msra.mxu0 0
        %1614 = vmatprep.subr.bf16.mxu0 0
        %1615 = vmatpush1.bf16.msra.mxu0 0
        %1616 = vmatprep.subr.bf16.mxu0 0
        %1617 = vmatpush1.bf16.msra.mxu0 0
        %1618 = vmatprep.subr.bf16.mxu0 0
        %1619 = vmatpush1.bf16.msra.mxu0 0
        %1620 = vmatprep.subr.bf16.mxu0 0
        %1621 = vmatpush1.bf16.msra.mxu0 0
        %1622 = vmatprep.subr.bf16.mxu0 0
        %1623 = vmatpush1.bf16.msra.mxu0 0
        %1624 = vmatprep.subr.bf16.mxu0 0
        %1625 = vmatpush1.bf16.msra.mxu0 0
        %1626 = vmatprep.subr.bf16.mxu0 0
        %1627 = vmatpush1.bf16.msra.mxu0 0
        %1628 = vmatprep.mubr.bf16.mxu0 0
        %1629 = vmatmul.mubr.bf16.gmra.mrb[0].mxu0 %v1569
        %v1630 = vpop.f32.mrb[0].mxu0
        %v1631 = vadd.f32 0.0, %v1630
        %v1632 = vpop.f32.mrb[0].mxu0
        %v1633 = vpop.f32.mrb[0].mxu0
        %v1634 = vadd.f32 0.0, %v1633
        %v1635 = vpop.f32.mrb[0].mxu0
        %1636 = vmatprep.mubr.bf16.mxu0 0
        %1637 = vmatmul.mubr.bf16.gmra.mrb[0].mxu0 %v1572
        %v1638 = vpop.f32.mrb[0].mxu0
        %v1639 = vadd.f32 0.0, %v1638
        %v1640 = vpop.f32.mrb[0].mxu0
        %v1641 = vpop.f32.mrb[0].mxu0
        %v1642 = vadd.f32 0.0, %v1641
        %v1643 = vpop.f32.mrb[0].mxu0
        %1644 = vmatprep.mubr.bf16.mxu0 0
        %1645 = vmatmul.mubr.bf16.gmra.mrb[0].mxu0 %v1575
        %v1646 = vpop.f32.mrb[0].mxu0
        %v1647 = vadd.f32 0.0, %v1646
        %v1648 = vpop.f32.mrb[0].mxu0
        %v1649 = vpop.f32.mrb[0].mxu0
        %v1650 = vadd.f32 0.0, %v1649
        %v1651 = vpop.f32.mrb[0].mxu0
        %1652 = vmatprep.mubr.bf16.mxu0 0
        %1653 = vmatmul.mubr.bf16.gmra.mrb[0].mxu0 %v1578
        %v1654 = vpop.f32.mrb[0].mxu0
        %v1655 = vadd.f32 0.0, %v1654
        %v1656 = vpop.f32.mrb[0].mxu0
        %v1657 = vpop.f32.mrb[0].mxu0
        %v1658 = vadd.f32 0.0, %v1657
        %v1659 = vpop.f32.mrb[0].mxu0
        %1660 = vmatprep.mubr.bf16.mxu0 0
        %1661 = vmatmul.mubr.bf16.gmra.mrb[0].mxu0 %v1581
        %v1662 = vpop.f32.mrb[0].mxu0
        %v1663 = vadd.f32 0.0, %v1662
        %v1664 = vpop.f32.mrb[0].mxu0
        %v1665 = vpop.f32.mrb[0].mxu0
        %v1666 = vadd.f32 0.0, %v1665
        %v1667 = vpop.f32.mrb[0].mxu0
        %1668 = vmatprep.mubr.bf16.mxu0 0
        %1669 = vmatmul.mubr.bf16.gmra.mrb[0].mxu0 %v1584
        %v1670 = vpop.f32.mrb[0].mxu0
        %v1671 = vadd.f32 0.0, %v1670
        %v1672 = vpop.f32.mrb[0].mxu0
        %v1673 = vpop.f32.mrb[0].mxu0
        %v1674 = vadd.f32 0.0, %v1673
        %v1675 = vpop.f32.mrb[0].mxu0
        %1676 = vmatprep.mubr.bf16.mxu0 0
        %1677 = vmatmul.mubr.bf16.gmra.mrb[0].mxu0 %v1587
        %v1678 = vpop.f32.mrb[0].mxu0
        %v1679 = vadd.f32 0.0, %v1678
        %v1680 = vpop.f32.mrb[0].mxu0
        %v1681 = vpop.f32.mrb[0].mxu0
        %v1682 = vadd.f32 0.0, %v1681
        %v1683 = vpop.f32.mrb[0].mxu0
        %1684 = vmatprep.mubr.bf16.mxu0 0
        %1685 = vmatmul.mubr.bf16.gmra.mrb[0].mxu0 %v1590
        %v1686 = vpop.f32.mrb[0].mxu0
        %v1687 = vadd.f32 0.0, %v1686
        %v1688 = vpop.f32.mrb[0].mxu0
        %v1689 = vpop.f32.mrb[0].mxu0
        %v1690 = vadd.f32 0.0, %v1689
        %v1691 = vpop.f32.mrb[0].mxu0
        %1692 = vdwg.mxu0
        %v1709 = vunpack.c.l.b16 %v1495
        %v1710 = vunpack.c.l.b16 %v1496
        %v1711 = vunpack.c.l.b16 %v1497
        %v1712 = vunpack.c.l.b16 %v1498
        %v1713 = vunpack.c.l.b16 %v1499
        %v1714 = vunpack.c.l.b16 %v1500
        %v1715 = vunpack.c.l.b16 %v1501
        %v1716 = vunpack.c.l.b16 %v1502
        %v1717 = vunpack.c.l.b16 %v1503
        %v1718 = vunpack.c.l.b16 %v1504
        %v1719 = vunpack.c.l.b16 %v1505
        %v1720 = vunpack.c.l.b16 %v1506
        %v1721 = vunpack.c.l.b16 %v1507
        %v1722 = vunpack.c.l.b16 %v1508
        %v1723 = vunpack.c.l.b16 %v1509
        %v1724 = vunpack.c.l.b16 %v1510
        %v1725 = vpack.c.b16 %v1710, %v1709
        %v1726 = vpack.c.b16 %v1712, %v1711
        %v1727 = vpack.c.b16 %v1714, %v1713
        %v1728 = vpack.c.b16 %v1716, %v1715
        %v1729 = vpack.c.b16 %v1718, %v1717
        %v1730 = vpack.c.b16 %v1720, %v1719
        %v1731 = vpack.c.b16 %v1722, %v1721
        %v1732 = vpack.c.b16 %v1724, %v1723
        %v1734 = vsel %vm1198, %v1725, 0
        %v1737 = vsel %vm1198, %v1726, 0
        %v1740 = vsel %vm1198, %v1727, 0
        %v1743 = vsel %vm1198, %v1728, 0
        %v1746 = vsel %vm1198, %v1729, 0
        %v1749 = vsel %vm1198, %v1730, 0
        %v1752 = vsel %vm1198, %v1731, 0
        %v1755 = vsel %vm1198, %v1732, 0
        %1757 = vmatprep.subr.bf16.mxu0 0
        %1758 = vmatpush1.bf16.msra.mxu0 %v966
        %1759 = vmatprep.subr.bf16.mxu0 0
        %1760 = vmatpush1.bf16.msra.mxu0 %v967
        %1761 = vmatprep.subr.bf16.mxu0 0
        %1762 = vmatpush1.bf16.msra.mxu0 %v968
        %1763 = vmatprep.subr.bf16.mxu0 0
        %1764 = vmatpush1.bf16.msra.mxu0 %v969
        %1765 = vmatprep.subr.bf16.mxu0 0
        %1766 = vmatpush1.bf16.msra.mxu0 0
        %1767 = vmatprep.subr.bf16.mxu0 0
        %1768 = vmatpush1.bf16.msra.mxu0 0
        %1769 = vmatprep.subr.bf16.mxu0 0
        %1770 = vmatpush1.bf16.msra.mxu0 0
        %1771 = vmatprep.subr.bf16.mxu0 0
        %1772 = vmatpush1.bf16.msra.mxu0 0
        %1773 = vmatprep.subr.bf16.mxu0 0
        %1774 = vmatpush1.bf16.msra.mxu0 0
        %1775 = vmatprep.subr.bf16.mxu0 0
        %1776 = vmatpush1.bf16.msra.mxu0 0
        %1777 = vmatprep.subr.bf16.mxu0 0
        %1778 = vmatpush1.bf16.msra.mxu0 0
        %1779 = vmatprep.subr.bf16.mxu0 0
        %1780 = vmatpush1.bf16.msra.mxu0 0
        %1781 = vmatprep.subr.bf16.mxu0 0
        %1782 = vmatpush1.bf16.msra.mxu0 0
        %1783 = vmatprep.subr.bf16.mxu0 0
        %1784 = vmatpush1.bf16.msra.mxu0 0
        %1785 = vmatprep.subr.bf16.mxu0 0
        %1786 = vmatpush1.bf16.msra.mxu0 0
        %1787 = vmatprep.subr.bf16.mxu0 0
        %1788 = vmatpush1.bf16.msra.mxu0 0
        %1789 = vmatprep.mubr.bf16.mxu0 0
        %1790 = vmatmul.mubr.bf16.gmra.mrb[0].mxu0 %v1734
        %v1791 = vpop.f32.mrb[0].mxu0
        %v1792 = vadd.f32 %v1631, %v1791
        %v1793 = vpop.f32.mrb[0].mxu0
        %v1794 = vpop.f32.mrb[0].mxu0
        %v1795 = vadd.f32 %v1634, %v1794
        %v1796 = vpop.f32.mrb[0].mxu0
        %1797 = vmatprep.mubr.bf16.mxu0 0
        %1798 = vmatmul.mubr.bf16.gmra.mrb[0].mxu0 %v1737
        %v1799 = vpop.f32.mrb[0].mxu0
        %v1800 = vadd.f32 %v1639, %v1799
        %v1801 = vpop.f32.mrb[0].mxu0
        %v1802 = vpop.f32.mrb[0].mxu0
        %v1803 = vadd.f32 %v1642, %v1802
        %v1804 = vpop.f32.mrb[0].mxu0
        %1805 = vmatprep.mubr.bf16.mxu0 0
        %1806 = vmatmul.mubr.bf16.gmra.mrb[0].mxu0 %v1740
        %v1807 = vpop.f32.mrb[0].mxu0
        %v1808 = vadd.f32 %v1647, %v1807
        %v1809 = vpop.f32.mrb[0].mxu0
        %v1810 = vpop.f32.mrb[0].mxu0
        %v1811 = vadd.f32 %v1650, %v1810
        %v1812 = vpop.f32.mrb[0].mxu0
        %1813 = vmatprep.mubr.bf16.mxu0 0
        %1814 = vmatmul.mubr.bf16.gmra.mrb[0].mxu0 %v1743
        %v1815 = vpop.f32.mrb[0].mxu0
        %v1816 = vadd.f32 %v1655, %v1815
        %v1817 = vpop.f32.mrb[0].mxu0
        %v1818 = vpop.f32.mrb[0].mxu0
        %v1819 = vadd.f32 %v1658, %v1818
        %v1820 = vpop.f32.mrb[0].mxu0
        %1821 = vmatprep.mubr.bf16.mxu0 0
        %1822 = vmatmul.mubr.bf16.gmra.mrb[0].mxu0 %v1746
        %v1823 = vpop.f32.mrb[0].mxu0
        %v1824 = vadd.f32 %v1663, %v1823
        %v1825 = vpop.f32.mrb[0].mxu0
        %v1826 = vpop.f32.mrb[0].mxu0
        %v1827 = vadd.f32 %v1666, %v1826
        %v1828 = vpop.f32.mrb[0].mxu0
        %1829 = vmatprep.mubr.bf16.mxu0 0
        %1830 = vmatmul.mubr.bf16.gmra.mrb[0].mxu0 %v1749
        %v1831 = vpop.f32.mrb[0].mxu0
        %v1832 = vadd.f32 %v1671, %v1831
        %v1833 = vpop.f32.mrb[0].mxu0
        %v1834 = vpop.f32.mrb[0].mxu0
        %v1835 = vadd.f32 %v1674, %v1834
        %v1836 = vpop.f32.mrb[0].mxu0
        %1837 = vmatprep.mubr.bf16.mxu0 0
        %1838 = vmatmul.mubr.bf16.gmra.mrb[0].mxu0 %v1752
        %v1839 = vpop.f32.mrb[0].mxu0
        %v1840 = vadd.f32 %v1679, %v1839
        %v1841 = vpop.f32.mrb[0].mxu0
        %v1842 = vpop.f32.mrb[0].mxu0
        %v1843 = vadd.f32 %v1682, %v1842
        %v1844 = vpop.f32.mrb[0].mxu0
        %1845 = vmatprep.mubr.bf16.mxu0 0
        %1846 = vmatmul.mubr.bf16.gmra.mrb[0].mxu0 %v1755
        %v1847 = vpop.f32.mrb[0].mxu0
        %v1848 = vadd.f32 %v1687, %v1847
        %v1849 = vpop.f32.mrb[0].mxu0
        %v1850 = vpop.f32.mrb[0].mxu0
        %v1851 = vadd.f32 %v1690, %v1850
        %v1852 = vpop.f32.mrb[0].mxu0
        %1853 = vdwg.mxu0
        %v1854 = vld [vmem:[%s11] sm:$0xff]
        %v1855 = vld [vmem:[%s11 + $0x8] sm:$0xff]
        %v1856 = vld [vmem:[%s11 + $0x10] sm:$0xff]
        %v1857 = vld [vmem:[%s11 + $0x18] sm:$0xff]
        %v1858 = vld [vmem:[%s11 + $0x20] sm:$0xff]
        %v1859 = vld [vmem:[%s11 + $0x28] sm:$0xff]
        %v1860 = vld [vmem:[%s11 + $0x30] sm:$0xff]
        %v1861 = vld [vmem:[%s11 + $0x38] sm:$0xff]
        %v1862 = vld [vmem:[%s11 + $0x40] sm:$0xff]
        %v1863 = vld [vmem:[%s11 + $0x48] sm:$0xff]
        %v1864 = vld [vmem:[%s11 + $0x50] sm:$0xff]
        %v1865 = vld [vmem:[%s11 + $0x58] sm:$0xff]
        %v1866 = vld [vmem:[%s11 + $0x60] sm:$0xff]
        %v1867 = vld [vmem:[%s11 + $0x68] sm:$0xff]
        %v1868 = vld [vmem:[%s11 + $0x70] sm:$0xff]
        %v1869 = vld [vmem:[%s11 + $0x78] sm:$0xff]
        %1871 = vset.pattern.permute.xlu0 0
        %1872 = vperm.xlu0 %1871, %v1854
        %v1873 = vpop.permute.xlu0 %1872
        %1876 = vset.pattern.permute.xlu0 0
        %1877 = vperm.xlu0 %1876, %v1855
        %v1878 = vpop.permute.xlu0 %1877
        %1881 = vset.pattern.permute.xlu0 0
        %1882 = vperm.xlu0 %1881, %v1856
        %v1883 = vpop.permute.xlu0 %1882
        %1886 = vset.pattern.permute.xlu0 0
        %1887 = vperm.xlu0 %1886, %v1857
        %v1888 = vpop.permute.xlu0 %1887
        %1891 = vset.pattern.permute.xlu0 0
        %1892 = vperm.xlu0 %1891, %v1858
        %v1893 = vpop.permute.xlu0 %1892
        %1896 = vset.pattern.permute.xlu0 0
        %1897 = vperm.xlu0 %1896, %v1859
        %v1898 = vpop.permute.xlu0 %1897
        %1901 = vset.pattern.permute.xlu0 0
        %1902 = vperm.xlu0 %1901, %v1860
        %v1903 = vpop.permute.xlu0 %1902
        %1906 = vset.pattern.permute.xlu0 0
        %1907 = vperm.xlu0 %1906, %v1861
        %v1908 = vpop.permute.xlu0 %1907
        %1911 = vset.pattern.permute.xlu0 0
        %1912 = vperm.xlu0 %1911, %v1862
        %v1913 = vpop.permute.xlu0 %1912
        %1916 = vset.pattern.permute.xlu0 0
        %1917 = vperm.xlu0 %1916, %v1863
        %v1918 = vpop.permute.xlu0 %1917
        %1921 = vset.pattern.permute.xlu0 0
        %1922 = vperm.xlu0 %1921, %v1864
        %v1923 = vpop.permute.xlu0 %1922
        %1926 = vset.pattern.permute.xlu0 0
        %1927 = vperm.xlu0 %1926, %v1865
        %v1928 = vpop.permute.xlu0 %1927
        %1931 = vset.pattern.permute.xlu0 0
        %1932 = vperm.xlu0 %1931, %v1866
        %v1933 = vpop.permute.xlu0 %1932
        %1936 = vset.pattern.permute.xlu0 0
        %1937 = vperm.xlu0 %1936, %v1867
        %v1938 = vpop.permute.xlu0 %1937
        %1941 = vset.pattern.permute.xlu0 0
        %1942 = vperm.xlu0 %1941, %v1868
        %v1943 = vpop.permute.xlu0 %1942
        %1946 = vset.pattern.permute.xlu0 0
        %1947 = vperm.xlu0 %1946, %v1869
        %v1948 = vpop.permute.xlu0 %1947
        %v1950 = vadd.f32 %v1792, %v1873
        %v1951 = vadd.f32 %v1795, %v1878
        %v1952 = vadd.f32 %v1800, %v1883
        %v1953 = vadd.f32 %v1803, %v1888
        %v1954 = vadd.f32 %v1808, %v1893
        %v1955 = vadd.f32 %v1811, %v1898
        %v1956 = vadd.f32 %v1816, %v1903
        %v1957 = vadd.f32 %v1819, %v1908
        %v1958 = vadd.f32 %v1824, %v1913
        %v1959 = vadd.f32 %v1827, %v1918
        %v1960 = vadd.f32 %v1832, %v1923
        %v1961 = vadd.f32 %v1835, %v1928
        %v1962 = vadd.f32 %v1840, %v1933
        %v1963 = vadd.f32 %v1843, %v1938
        %v1964 = vadd.f32 %v1848, %v1943
        %v1965 = vadd.f32 %v1851, %v1948
        %v1966 = vmax.f32 %v1950, 0.0
        %v1967 = vmax.f32 %v1951, 0.0
        %v1968 = vmax.f32 %v1952, 0.0
        %v1969 = vmax.f32 %v1953, 0.0
        %v1970 = vmax.f32 %v1954, 0.0
        %v1971 = vmax.f32 %v1955, 0.0
        %v1972 = vmax.f32 %v1956, 0.0
        %v1973 = vmax.f32 %v1957, 0.0
        %v1974 = vmax.f32 %v1958, 0.0
        %v1975 = vmax.f32 %v1959, 0.0
        %v1976 = vmax.f32 %v1960, 0.0
        %v1977 = vmax.f32 %v1961, 0.0
        %v1978 = vmax.f32 %v1962, 0.0
        %v1979 = vmax.f32 %v1963, 0.0
        %v1980 = vmax.f32 %v1964, 0.0
        %v1981 = vmax.f32 %v1965, 0.0
        %v1982 = vpack.c.bf16 %v1967, %v1966
        %v1983 = vpack.c.bf16 %v1969, %v1968
        %v1984 = vpack.c.bf16 %v1971, %v1970
        %v1985 = vpack.c.bf16 %v1973, %v1972
        %v1986 = vpack.c.bf16 %v1975, %v1974
        %v1987 = vpack.c.bf16 %v1977, %v1976
        %v1988 = vpack.c.bf16 %v1979, %v1978
        %v1989 = vpack.c.bf16 %v1981, %v1980
        %v1990 = vld [vmem:[%s12] sm:$0xf]
        %v1991 = vld [vmem:[%s12 + $0x4] sm:$0xf]
        %v1992 = vld [vmem:[%s12 + $0x8] sm:$0xf]
        %v1993 = vld [vmem:[%s12 + $0xc] sm:$0xf]
        %v1994 = vld [vmem:[%s12 + $0x10] sm:$0xf]
        %v1995 = vld [vmem:[%s12 + $0x14] sm:$0xf]
        %v1996 = vld [vmem:[%s12 + $0x18] sm:$0xf]
        %v1997 = vld [vmem:[%s12 + $0x1c] sm:$0xf]
        %v1998 = vld [vmem:[%s12 + $0x20] sm:$0xf]
        %v1999 = vld [vmem:[%s12 + $0x24] sm:$0xf]
        %v2000 = vld [vmem:[%s12 + $0x28] sm:$0xf]
        %v2001 = vld [vmem:[%s12 + $0x2c] sm:$0xf]
        %v2002 = vld [vmem:[%s12 + $0x30] sm:$0xf]
        %v2003 = vld [vmem:[%s12 + $0x34] sm:$0xf]
        %v2004 = vld [vmem:[%s12 + $0x38] sm:$0xf]
        %v2005 = vld [vmem:[%s12 + $0x3c] sm:$0xf]
        %v2006 = vld [vmem:[%s13] sm:$0xff]
        %v2007 = vld [vmem:[%s13 + $0x8] sm:$0xff]
        %v2008 = vld [vmem:[%s13 + $0x10] sm:$0xff]
        %v2009 = vld [vmem:[%s13 + $0x18] sm:$0xff]
        %v2010 = vld [vmem:[%s13 + $0x20] sm:$0xff]
        %v2011 = vld [vmem:[%s13 + $0x28] sm:$0xff]
        %v2012 = vld [vmem:[%s13 + $0x30] sm:$0xff]
        %v2013 = vld [vmem:[%s13 + $0x38] sm:$0xff]
        %v2014 = vld [vmem:[%s13 + $0x40] sm:$0xff]
        %v2015 = vld [vmem:[%s13 + $0x48] sm:$0xff]
        %v2016 = vld [vmem:[%s13 + $0x50] sm:$0xff]
        %v2017 = vld [vmem:[%s13 + $0x58] sm:$0xff]
        %v2018 = vld [vmem:[%s13 + $0x60] sm:$0xff]
        %v2019 = vld [vmem:[%s13 + $0x68] sm:$0xff]
        %v2020 = vld [vmem:[%s13 + $0x70] sm:$0xff]
        %v2021 = vld [vmem:[%s13 + $0x78] sm:$0xff]
        %2023 = vset.pattern.permute.xlu0 0
        %2024 = vperm.xlu0 %2023, %v2006
        %v2025 = vpop.permute.xlu0 %2024
        %2028 = vset.pattern.permute.xlu0 0
        %2029 = vperm.xlu0 %2028, %v2007
        %v2030 = vpop.permute.xlu0 %2029
        %2033 = vset.pattern.permute.xlu0 0
        %2034 = vperm.xlu0 %2033, %v2008
        %v2035 = vpop.permute.xlu0 %2034
        %2038 = vset.pattern.permute.xlu0 0
        %2039 = vperm.xlu0 %2038, %v2009
        %v2040 = vpop.permute.xlu0 %2039
        %2043 = vset.pattern.permute.xlu0 0
        %2044 = vperm.xlu0 %2043, %v2010
        %v2045 = vpop.permute.xlu0 %2044
        %2048 = vset.pattern.permute.xlu0 0
        %2049 = vperm.xlu0 %2048, %v2011
        %v2050 = vpop.permute.xlu0 %2049
        %2053 = vset.pattern.permute.xlu0 0
        %2054 = vperm.xlu0 %2053, %v2012
        %v2055 = vpop.permute.xlu0 %2054
        %2058 = vset.pattern.permute.xlu0 0
        %2059 = vperm.xlu0 %2058, %v2013
        %v2060 = vpop.permute.xlu0 %2059
        %2063 = vset.pattern.permute.xlu0 0
        %2064 = vperm.xlu0 %2063, %v2014
        %v2065 = vpop.permute.xlu0 %2064
        %2068 = vset.pattern.permute.xlu0 0
        %2069 = vperm.xlu0 %2068, %v2015
        %v2070 = vpop.permute.xlu0 %2069
        %2073 = vset.pattern.permute.xlu0 0
        %2074 = vperm.xlu0 %2073, %v2016
        %v2075 = vpop.permute.xlu0 %2074
        %2078 = vset.pattern.permute.xlu0 0
        %2079 = vperm.xlu0 %2078, %v2017
        %v2080 = vpop.permute.xlu0 %2079
        %2083 = vset.pattern.permute.xlu0 0
        %2084 = vperm.xlu0 %2083, %v2018
        %v2085 = vpop.permute.xlu0 %2084
        %2088 = vset.pattern.permute.xlu0 0
        %2089 = vperm.xlu0 %2088, %v2019
        %v2090 = vpop.permute.xlu0 %2089
        %2093 = vset.pattern.permute.xlu0 0
        %2094 = vperm.xlu0 %2093, %v2020
        %v2095 = vpop.permute.xlu0 %2094
        %2098 = vset.pattern.permute.xlu0 0
        %2099 = vperm.xlu0 %2098, %v2021
        %v2100 = vpop.permute.xlu0 %2099
        %v2118 = vunpack.c.l.b16 %v1990
        %v2119 = vunpack.c.l.b16 %v1991
        %v2120 = vunpack.c.l.b16 %v1992
        %v2121 = vunpack.c.l.b16 %v1993
        %v2122 = vunpack.c.l.b16 %v1994
        %v2123 = vunpack.c.l.b16 %v1995
        %v2124 = vunpack.c.l.b16 %v1996
        %v2125 = vunpack.c.l.b16 %v1997
        %v2126 = vunpack.c.l.b16 %v1998
        %v2127 = vunpack.c.l.b16 %v1999
        %v2128 = vunpack.c.l.b16 %v2000
        %v2129 = vunpack.c.l.b16 %v2001
        %v2130 = vunpack.c.l.b16 %v2002
        %v2131 = vunpack.c.l.b16 %v2003
        %v2132 = vunpack.c.l.b16 %v2004
        %v2133 = vunpack.c.l.b16 %v2005
        %v2134 = vpack.c.b16 %v2119, %v2118
        %v2135 = vpack.c.b16 %v2121, %v2120
        %v2136 = vpack.c.b16 %v2123, %v2122
        %v2137 = vpack.c.b16 %v2125, %v2124
        %v2138 = vpack.c.b16 %v2127, %v2126
        %v2139 = vpack.c.b16 %v2129, %v2128
        %v2140 = vpack.c.b16 %v2131, %v2130
        %v2141 = vpack.c.b16 %v2133, %v2132
        %2150 = vmatprep.subr.bf16.mxu0 0
        %2151 = vmatpush1.bf16.msra.mxu0 %v1982
        %2152 = vmatprep.subr.bf16.mxu0 0
        %2153 = vmatpush1.bf16.msra.mxu0 %v1983
        %2154 = vmatprep.subr.bf16.mxu0 0
        %2155 = vmatpush1.bf16.msra.mxu0 %v1984
        %2156 = vmatprep.subr.bf16.mxu0 0
        %2157 = vmatpush1.bf16.msra.mxu0 %v1985
        %2158 = vmatprep.subr.bf16.mxu0 0
        %2159 = vmatpush1.bf16.msra.mxu0 %v1986
        %2160 = vmatprep.subr.bf16.mxu0 0
        %2161 = vmatpush1.bf16.msra.mxu0 %v1987
        %2162 = vmatprep.subr.bf16.mxu0 0
        %2163 = vmatpush1.bf16.msra.mxu0 %v1988
        %2164 = vmatprep.subr.bf16.mxu0 0
        %2165 = vmatpush1.bf16.msra.mxu0 %v1989
        %2166 = vmatprep.subr.bf16.mxu0 0
        %2167 = vmatpush1.bf16.msra.mxu0 0
        %2168 = vmatprep.subr.bf16.mxu0 0
        %2169 = vmatpush1.bf16.msra.mxu0 0
        %2170 = vmatprep.subr.bf16.mxu0 0
        %2171 = vmatpush1.bf16.msra.mxu0 0
        %2172 = vmatprep.subr.bf16.mxu0 0
        %2173 = vmatpush1.bf16.msra.mxu0 0
        %2174 = vmatprep.subr.bf16.mxu0 0
        %2175 = vmatpush1.bf16.msra.mxu0 0
        %2176 = vmatprep.subr.bf16.mxu0 0
        %2177 = vmatpush1.bf16.msra.mxu0 0
        %2178 = vmatprep.subr.bf16.mxu0 0
        %2179 = vmatpush1.bf16.msra.mxu0 0
        %2180 = vmatprep.subr.bf16.mxu0 0
        %2181 = vmatpush1.bf16.msra.mxu0 0
        %2182 = vmatprep.mubr.bf16.mxu0 0
        %2183 = vmatmul.mubr.bf16.gmra.mrb[0].mxu0 %v2134
        %v2184 = vpop.f32.mrb[0].mxu0
        %v2185 = vadd.f32 %v2025, %v2184
        %v2186 = vpop.f32.mrb[0].mxu0
        %v2187 = vpop.f32.mrb[0].mxu0
        %v2188 = vadd.f32 %v2030, %v2187
        %v2189 = vpop.f32.mrb[0].mxu0
        %2190 = vmatprep.mubr.bf16.mxu0 0
        %2191 = vmatmul.mubr.bf16.gmra.mrb[0].mxu0 %v2135
        %v2192 = vpop.f32.mrb[0].mxu0
        %v2193 = vadd.f32 %v2035, %v2192
        %v2194 = vpop.f32.mrb[0].mxu0
        %v2195 = vpop.f32.mrb[0].mxu0
        %v2196 = vadd.f32 %v2040, %v2195
        %v2197 = vpop.f32.mrb[0].mxu0
        %2198 = vmatprep.mubr.bf16.mxu0 0
        %2199 = vmatmul.mubr.bf16.gmra.mrb[0].mxu0 %v2136
        %v2200 = vpop.f32.mrb[0].mxu0
        %v2201 = vadd.f32 %v2045, %v2200
        %v2202 = vpop.f32.mrb[0].mxu0
        %v2203 = vpop.f32.mrb[0].mxu0
        %v2204 = vadd.f32 %v2050, %v2203
        %v2205 = vpop.f32.mrb[0].mxu0
        %2206 = vmatprep.mubr.bf16.mxu0 0
        %2207 = vmatmul.mubr.bf16.gmra.mrb[0].mxu0 %v2137
        %v2208 = vpop.f32.mrb[0].mxu0
        %v2209 = vadd.f32 %v2055, %v2208
        %v2210 = vpop.f32.mrb[0].mxu0
        %v2211 = vpop.f32.mrb[0].mxu0
        %v2212 = vadd.f32 %v2060, %v2211
        %v2213 = vpop.f32.mrb[0].mxu0
        %2214 = vmatprep.mubr.bf16.mxu0 0
        %2215 = vmatmul.mubr.bf16.gmra.mrb[0].mxu0 %v2138
        %v2216 = vpop.f32.mrb[0].mxu0
        %v2217 = vadd.f32 %v2065, %v2216
        %v2218 = vpop.f32.mrb[0].mxu0
        %v2219 = vpop.f32.mrb[0].mxu0
        %v2220 = vadd.f32 %v2070, %v2219
        %v2221 = vpop.f32.mrb[0].mxu0
        %2222 = vmatprep.mubr.bf16.mxu0 0
        %2223 = vmatmul.mubr.bf16.gmra.mrb[0].mxu0 %v2139
        %v2224 = vpop.f32.mrb[0].mxu0
        %v2225 = vadd.f32 %v2075, %v2224
        %v2226 = vpop.f32.mrb[0].mxu0
        %v2227 = vpop.f32.mrb[0].mxu0
        %v2228 = vadd.f32 %v2080, %v2227
        %v2229 = vpop.f32.mrb[0].mxu0
        %2230 = vmatprep.mubr.bf16.mxu0 0
        %2231 = vmatmul.mubr.bf16.gmra.mrb[0].mxu0 %v2140
        %v2232 = vpop.f32.mrb[0].mxu0
        %v2233 = vadd.f32 %v2085, %v2232
        %v2234 = vpop.f32.mrb[0].mxu0
        %v2235 = vpop.f32.mrb[0].mxu0
        %v2236 = vadd.f32 %v2090, %v2235
        %v2237 = vpop.f32.mrb[0].mxu0
        %2238 = vmatprep.mubr.bf16.mxu0 0
        %2239 = vmatmul.mubr.bf16.gmra.mrb[0].mxu0 %v2141
        %v2240 = vpop.f32.mrb[0].mxu0
        %v2241 = vadd.f32 %v2095, %v2240
        %v2242 = vpop.f32.mrb[0].mxu0
        %v2243 = vpop.f32.mrb[0].mxu0
        %v2244 = vadd.f32 %v2100, %v2243
        %v2245 = vpop.f32.mrb[0].mxu0
        %2246 = vdwg.mxu0
        %v2247 = vmax.f32 %v2185, 0.0
        %v2248 = vmax.f32 %v2188, 0.0
        %v2249 = vmax.f32 %v2193, 0.0
        %v2250 = vmax.f32 %v2196, 0.0
        %v2251 = vmax.f32 %v2201, 0.0
        %v2252 = vmax.f32 %v2204, 0.0
        %v2253 = vmax.f32 %v2209, 0.0
        %v2254 = vmax.f32 %v2212, 0.0
        %v2255 = vmax.f32 %v2217, 0.0
        %v2256 = vmax.f32 %v2220, 0.0
        %v2257 = vmax.f32 %v2225, 0.0
        %v2258 = vmax.f32 %v2228, 0.0
        %v2259 = vmax.f32 %v2233, 0.0
        %v2260 = vmax.f32 %v2236, 0.0
        %v2261 = vmax.f32 %v2241, 0.0
        %v2262 = vmax.f32 %v2244, 0.0
        %v2263 = vpack.c.bf16 %v2248, %v2247
        %v2264 = vpack.c.bf16 %v2250, %v2249
        %v2265 = vpack.c.bf16 %v2252, %v2251
        %v2266 = vpack.c.bf16 %v2254, %v2253
        %v2267 = vpack.c.bf16 %v2256, %v2255
        %v2268 = vpack.c.bf16 %v2258, %v2257
        %v2269 = vpack.c.bf16 %v2260, %v2259
        %v2270 = vpack.c.bf16 %v2262, %v2261
        %v2271 = vld [vmem:[%s14] sm:$0xf]
        %v2272 = vld [vmem:[%s14 + $0x4] sm:$0xf]
        %v2273 = vld [vmem:[%s14 + $0x8] sm:$0xf]
        %v2274 = vld [vmem:[%s14 + $0xc] sm:$0xf]
        %v2275 = vld [vmem:[%s14 + $0x10] sm:$0xf]
        %v2276 = vld [vmem:[%s14 + $0x14] sm:$0xf]
        %v2277 = vld [vmem:[%s14 + $0x18] sm:$0xf]
        %v2278 = vld [vmem:[%s14 + $0x1c] sm:$0xf]
        %v2279 = vld [vmem:[%s14 + $0x20] sm:$0xf]
        %v2280 = vld [vmem:[%s14 + $0x24] sm:$0xf]
        %v2281 = vld [vmem:[%s14 + $0x28] sm:$0xf]
        %v2282 = vld [vmem:[%s14 + $0x2c] sm:$0xf]
        %v2283 = vld [vmem:[%s14 + $0x30] sm:$0xf]
        %v2284 = vld [vmem:[%s14 + $0x34] sm:$0xf]
        %v2285 = vld [vmem:[%s14 + $0x38] sm:$0xf]
        %v2286 = vld [vmem:[%s14 + $0x3c] sm:$0xf]
        %v2287 = vld [vmem:[%s15] sm:$0xff]
        %v2288 = vld [vmem:[%s15 + $0x8] sm:$0xff]
        %v2289 = vld [vmem:[%s15 + $0x10] sm:$0xff]
        %v2290 = vld [vmem:[%s15 + $0x18] sm:$0xff]
        %v2291 = vld [vmem:[%s15 + $0x20] sm:$0xff]
        %v2292 = vld [vmem:[%s15 + $0x28] sm:$0xff]
        %v2293 = vld [vmem:[%s15 + $0x30] sm:$0xff]
        %v2294 = vld [vmem:[%s15 + $0x38] sm:$0xff]
        %v2295 = vld [vmem:[%s15 + $0x40] sm:$0xff]
        %v2296 = vld [vmem:[%s15 + $0x48] sm:$0xff]
        %v2297 = vld [vmem:[%s15 + $0x50] sm:$0xff]
        %v2298 = vld [vmem:[%s15 + $0x58] sm:$0xff]
        %v2299 = vld [vmem:[%s15 + $0x60] sm:$0xff]
        %v2300 = vld [vmem:[%s15 + $0x68] sm:$0xff]
        %v2301 = vld [vmem:[%s15 + $0x70] sm:$0xff]
        %v2302 = vld [vmem:[%s15 + $0x78] sm:$0xff]
        %2304 = vset.pattern.permute.xlu0 0
        %2305 = vperm.xlu0 %2304, %v2287
        %v2306 = vpop.permute.xlu0 %2305
        %2309 = vset.pattern.permute.xlu0 0
        %2310 = vperm.xlu0 %2309, %v2288
        %v2311 = vpop.permute.xlu0 %2310
        %2314 = vset.pattern.permute.xlu0 0
        %2315 = vperm.xlu0 %2314, %v2289
        %v2316 = vpop.permute.xlu0 %2315
        %2319 = vset.pattern.permute.xlu0 0
        %2320 = vperm.xlu0 %2319, %v2290
        %v2321 = vpop.permute.xlu0 %2320
        %2324 = vset.pattern.permute.xlu0 0
        %2325 = vperm.xlu0 %2324, %v2291
        %v2326 = vpop.permute.xlu0 %2325
        %2329 = vset.pattern.permute.xlu0 0
        %2330 = vperm.xlu0 %2329, %v2292
        %v2331 = vpop.permute.xlu0 %2330
        %2334 = vset.pattern.permute.xlu0 0
        %2335 = vperm.xlu0 %2334, %v2293
        %v2336 = vpop.permute.xlu0 %2335
        %2339 = vset.pattern.permute.xlu0 0
        %2340 = vperm.xlu0 %2339, %v2294
        %v2341 = vpop.permute.xlu0 %2340
        %2344 = vset.pattern.permute.xlu0 0
        %2345 = vperm.xlu0 %2344, %v2295
        %v2346 = vpop.permute.xlu0 %2345
        %2349 = vset.pattern.permute.xlu0 0
        %2350 = vperm.xlu0 %2349, %v2296
        %v2351 = vpop.permute.xlu0 %2350
        %2354 = vset.pattern.permute.xlu0 0
        %2355 = vperm.xlu0 %2354, %v2297
        %v2356 = vpop.permute.xlu0 %2355
        %2359 = vset.pattern.permute.xlu0 0
        %2360 = vperm.xlu0 %2359, %v2298
        %v2361 = vpop.permute.xlu0 %2360
        %2364 = vset.pattern.permute.xlu0 0
        %2365 = vperm.xlu0 %2364, %v2299
        %v2366 = vpop.permute.xlu0 %2365
        %2369 = vset.pattern.permute.xlu0 0
        %2370 = vperm.xlu0 %2369, %v2300
        %v2371 = vpop.permute.xlu0 %2370
        %2374 = vset.pattern.permute.xlu0 0
        %2375 = vperm.xlu0 %2374, %v2301
        %v2376 = vpop.permute.xlu0 %2375
        %2379 = vset.pattern.permute.xlu0 0
        %2380 = vperm.xlu0 %2379, %v2302
        %v2381 = vpop.permute.xlu0 %2380
        %v2399 = vunpack.c.l.b16 %v2271
        %v2400 = vunpack.c.l.b16 %v2272
        %v2401 = vunpack.c.l.b16 %v2273
        %v2402 = vunpack.c.l.b16 %v2274
        %v2403 = vunpack.c.l.b16 %v2275
        %v2404 = vunpack.c.l.b16 %v2276
        %v2405 = vunpack.c.l.b16 %v2277
        %v2406 = vunpack.c.l.b16 %v2278
        %v2407 = vunpack.c.l.b16 %v2279
        %v2408 = vunpack.c.l.b16 %v2280
        %v2409 = vunpack.c.l.b16 %v2281
        %v2410 = vunpack.c.l.b16 %v2282
        %v2411 = vunpack.c.l.b16 %v2283
        %v2412 = vunpack.c.l.b16 %v2284
        %v2413 = vunpack.c.l.b16 %v2285
        %v2414 = vunpack.c.l.b16 %v2286
        %v2415 = vpack.c.b16 %v2400, %v2399
        %v2416 = vpack.c.b16 %v2402, %v2401
        %v2417 = vpack.c.b16 %v2404, %v2403
        %v2418 = vpack.c.b16 %v2406, %v2405
        %v2419 = vpack.c.b16 %v2408, %v2407
        %v2420 = vpack.c.b16 %v2410, %v2409
        %v2421 = vpack.c.b16 %v2412, %v2411
        %v2422 = vpack.c.b16 %v2414, %v2413
        %2431 = vmatprep.subr.bf16.mxu0 0
        %2432 = vmatpush1.bf16.msra.mxu0 %v2263
        %2433 = vmatprep.subr.bf16.mxu0 0
        %2434 = vmatpush1.bf16.msra.mxu0 %v2264
        %2435 = vmatprep.subr.bf16.mxu0 0
        %2436 = vmatpush1.bf16.msra.mxu0 %v2265
        %2437 = vmatprep.subr.bf16.mxu0 0
        %2438 = vmatpush1.bf16.msra.mxu0 %v2266
        %2439 = vmatprep.subr.bf16.mxu0 0
        %2440 = vmatpush1.bf16.msra.mxu0 %v2267
        %2441 = vmatprep.subr.bf16.mxu0 0
        %2442 = vmatpush1.bf16.msra.mxu0 %v2268
        %2443 = vmatprep.subr.bf16.mxu0 0
        %2444 = vmatpush1.bf16.msra.mxu0 %v2269
        %2445 = vmatprep.subr.bf16.mxu0 0
        %2446 = vmatpush1.bf16.msra.mxu0 %v2270
        %2447 = vmatprep.subr.bf16.mxu0 0
        %2448 = vmatpush1.bf16.msra.mxu0 0
        %2449 = vmatprep.subr.bf16.mxu0 0
        %2450 = vmatpush1.bf16.msra.mxu0 0
        %2451 = vmatprep.subr.bf16.mxu0 0
        %2452 = vmatpush1.bf16.msra.mxu0 0
        %2453 = vmatprep.subr.bf16.mxu0 0
        %2454 = vmatpush1.bf16.msra.mxu0 0
        %2455 = vmatprep.subr.bf16.mxu0 0
        %2456 = vmatpush1.bf16.msra.mxu0 0
        %2457 = vmatprep.subr.bf16.mxu0 0
        %2458 = vmatpush1.bf16.msra.mxu0 0
        %2459 = vmatprep.subr.bf16.mxu0 0
        %2460 = vmatpush1.bf16.msra.mxu0 0
        %2461 = vmatprep.subr.bf16.mxu0 0
        %2462 = vmatpush1.bf16.msra.mxu0 0
        %2463 = vmatprep.mubr.bf16.mxu0 0
        %2464 = vmatmul.mubr.bf16.gmra.mrb[0].mxu0 %v2415
        %v2465 = vpop.f32.mrb[0].mxu0
        %v2466 = vadd.f32 %v2306, %v2465
        %v2467 = vpop.f32.mrb[0].mxu0
        %v2468 = vpop.f32.mrb[0].mxu0
        %v2469 = vadd.f32 %v2311, %v2468
        %v2470 = vpop.f32.mrb[0].mxu0
        %2471 = vmatprep.mubr.bf16.mxu0 0
        %2472 = vmatmul.mubr.bf16.gmra.mrb[0].mxu0 %v2416
        %v2473 = vpop.f32.mrb[0].mxu0
        %v2474 = vadd.f32 %v2316, %v2473
        %v2475 = vpop.f32.mrb[0].mxu0
        %v2476 = vpop.f32.mrb[0].mxu0
        %v2477 = vadd.f32 %v2321, %v2476
        %v2478 = vpop.f32.mrb[0].mxu0
        %2479 = vmatprep.mubr.bf16.mxu0 0
        %2480 = vmatmul.mubr.bf16.gmra.mrb[0].mxu0 %v2417
        %v2481 = vpop.f32.mrb[0].mxu0
        %v2482 = vadd.f32 %v2326, %v2481
        %v2483 = vpop.f32.mrb[0].mxu0
        %v2484 = vpop.f32.mrb[0].mxu0
        %v2485 = vadd.f32 %v2331, %v2484
        %v2486 = vpop.f32.mrb[0].mxu0
        %2487 = vmatprep.mubr.bf16.mxu0 0
        %2488 = vmatmul.mubr.bf16.gmra.mrb[0].mxu0 %v2418
        %v2489 = vpop.f32.mrb[0].mxu0
        %v2490 = vadd.f32 %v2336, %v2489
        %v2491 = vpop.f32.mrb[0].mxu0
        %v2492 = vpop.f32.mrb[0].mxu0
        %v2493 = vadd.f32 %v2341, %v2492
        %v2494 = vpop.f32.mrb[0].mxu0
        %2495 = vmatprep.mubr.bf16.mxu0 0
        %2496 = vmatmul.mubr.bf16.gmra.mrb[0].mxu0 %v2419
        %v2497 = vpop.f32.mrb[0].mxu0
        %v2498 = vadd.f32 %v2346, %v2497
        %v2499 = vpop.f32.mrb[0].mxu0
        %v2500 = vpop.f32.mrb[0].mxu0
        %v2501 = vadd.f32 %v2351, %v2500
        %v2502 = vpop.f32.mrb[0].mxu0
        %2503 = vmatprep.mubr.bf16.mxu0 0
        %2504 = vmatmul.mubr.bf16.gmra.mrb[0].mxu0 %v2420
        %v2505 = vpop.f32.mrb[0].mxu0
        %v2506 = vadd.f32 %v2356, %v2505
        %v2507 = vpop.f32.mrb[0].mxu0
        %v2508 = vpop.f32.mrb[0].mxu0
        %v2509 = vadd.f32 %v2361, %v2508
        %v2510 = vpop.f32.mrb[0].mxu0
        %2511 = vmatprep.mubr.bf16.mxu0 0
        %2512 = vmatmul.mubr.bf16.gmra.mrb[0].mxu0 %v2421
        %v2513 = vpop.f32.mrb[0].mxu0
        %v2514 = vadd.f32 %v2366, %v2513
        %v2515 = vpop.f32.mrb[0].mxu0
        %v2516 = vpop.f32.mrb[0].mxu0
        %v2517 = vadd.f32 %v2371, %v2516
        %v2518 = vpop.f32.mrb[0].mxu0
        %2519 = vmatprep.mubr.bf16.mxu0 0
        %2520 = vmatmul.mubr.bf16.gmra.mrb[0].mxu0 %v2422
        %v2521 = vpop.f32.mrb[0].mxu0
        %v2522 = vadd.f32 %v2376, %v2521
        %v2523 = vpop.f32.mrb[0].mxu0
        %v2524 = vpop.f32.mrb[0].mxu0
        %v2525 = vadd.f32 %v2381, %v2524
        %v2526 = vpop.f32.mrb[0].mxu0
        %2527 = vdwg.mxu0
        %v2528 = vmax.f32 %v2466, 0.0
        %v2529 = vmax.f32 %v2469, 0.0
        %v2530 = vmax.f32 %v2474, 0.0
        %v2531 = vmax.f32 %v2477, 0.0
        %v2532 = vmax.f32 %v2482, 0.0
        %v2533 = vmax.f32 %v2485, 0.0
        %v2534 = vmax.f32 %v2490, 0.0
        %v2535 = vmax.f32 %v2493, 0.0
        %v2536 = vmax.f32 %v2498, 0.0
        %v2537 = vmax.f32 %v2501, 0.0
        %v2538 = vmax.f32 %v2506, 0.0
        %v2539 = vmax.f32 %v2509, 0.0
        %v2540 = vmax.f32 %v2514, 0.0
        %v2541 = vmax.f32 %v2517, 0.0
        %v2542 = vmax.f32 %v2522, 0.0
        %v2543 = vmax.f32 %v2525, 0.0
        %v2544 = vpack.c.bf16 %v2529, %v2528
        %v2545 = vpack.c.bf16 %v2531, %v2530
        %v2546 = vpack.c.bf16 %v2533, %v2532
        %v2547 = vpack.c.bf16 %v2535, %v2534
        %v2548 = vpack.c.bf16 %v2537, %v2536
        %v2549 = vpack.c.bf16 %v2539, %v2538
        %v2550 = vpack.c.bf16 %v2541, %v2540
        %v2551 = vpack.c.bf16 %v2543, %v2542
        %v2552 = vld [vmem:[%s16] sm:$0xf]
        %v2553 = vld [vmem:[%s16 + $0x4] sm:$0xf]
        %v2554 = vld [vmem:[%s16 + $0x8] sm:$0xf]
        %v2555 = vld [vmem:[%s16 + $0xc] sm:$0xf]
        %v2556 = vld [vmem:[%s16 + $0x10] sm:$0xf]
        %v2557 = vld [vmem:[%s16 + $0x14] sm:$0xf]
        %v2558 = vld [vmem:[%s16 + $0x18] sm:$0xf]
        %v2559 = vld [vmem:[%s16 + $0x1c] sm:$0xf]
        %v2560 = vld [vmem:[%s17] sm:$0xff]
        %v2561 = vld [vmem:[%s17 + $0x8] sm:$0xff]
        %v2562 = vld [vmem:[%s17 + $0x10] sm:$0xff]
        %v2563 = vld [vmem:[%s17 + $0x18] sm:$0xff]
        %v2564 = vld [vmem:[%s17 + $0x20] sm:$0xff]
        %v2565 = vld [vmem:[%s17 + $0x28] sm:$0xff]
        %v2566 = vld [vmem:[%s17 + $0x30] sm:$0xff]
        %v2567 = vld [vmem:[%s17 + $0x38] sm:$0xff]
        %2569 = vset.pattern.permute.xlu0 0
        %2570 = vperm.xlu0 %2569, %v2560
        %v2571 = vpop.permute.xlu0 %2570
        %2574 = vset.pattern.permute.xlu0 0
        %2575 = vperm.xlu0 %2574, %v2561
        %v2576 = vpop.permute.xlu0 %2575
        %2579 = vset.pattern.permute.xlu0 0
        %2580 = vperm.xlu0 %2579, %v2562
        %v2581 = vpop.permute.xlu0 %2580
        %2584 = vset.pattern.permute.xlu0 0
        %2585 = vperm.xlu0 %2584, %v2563
        %v2586 = vpop.permute.xlu0 %2585
        %2589 = vset.pattern.permute.xlu0 0
        %2590 = vperm.xlu0 %2589, %v2564
        %v2591 = vpop.permute.xlu0 %2590
        %2594 = vset.pattern.permute.xlu0 0
        %2595 = vperm.xlu0 %2594, %v2565
        %v2596 = vpop.permute.xlu0 %2595
        %2599 = vset.pattern.permute.xlu0 0
        %2600 = vperm.xlu0 %2599, %v2566
        %v2601 = vpop.permute.xlu0 %2600
        %2604 = vset.pattern.permute.xlu0 0
        %2605 = vperm.xlu0 %2604, %v2567
        %v2606 = vpop.permute.xlu0 %2605
        %v2616 = vunpack.c.l.b16 %v2552
        %v2617 = vunpack.c.l.b16 %v2553
        %v2618 = vunpack.c.l.b16 %v2554
        %v2619 = vunpack.c.l.b16 %v2555
        %v2620 = vunpack.c.l.b16 %v2556
        %v2621 = vunpack.c.l.b16 %v2557
        %v2622 = vunpack.c.l.b16 %v2558
        %v2623 = vunpack.c.l.b16 %v2559
        %v2624 = vpack.c.b16 %v2617, %v2616
        %v2625 = vpack.c.b16 %v2619, %v2618
        %v2626 = vpack.c.b16 %v2621, %v2620
        %v2627 = vpack.c.b16 %v2623, %v2622
        %2632 = vmatprep.subr.bf16.mxu0 0
        %2633 = vmatpush1.bf16.msra.mxu0 %v2544
        %2634 = vmatprep.subr.bf16.mxu0 0
        %2635 = vmatpush1.bf16.msra.mxu0 %v2545
        %2636 = vmatprep.subr.bf16.mxu0 0
        %2637 = vmatpush1.bf16.msra.mxu0 %v2546
        %2638 = vmatprep.subr.bf16.mxu0 0
        %2639 = vmatpush1.bf16.msra.mxu0 %v2547
        %2640 = vmatprep.subr.bf16.mxu0 0
        %2641 = vmatpush1.bf16.msra.mxu0 %v2548
        %2642 = vmatprep.subr.bf16.mxu0 0
        %2643 = vmatpush1.bf16.msra.mxu0 %v2549
        %2644 = vmatprep.subr.bf16.mxu0 0
        %2645 = vmatpush1.bf16.msra.mxu0 %v2550
        %2646 = vmatprep.subr.bf16.mxu0 0
        %2647 = vmatpush1.bf16.msra.mxu0 %v2551
        %2648 = vmatprep.subr.bf16.mxu0 0
        %2649 = vmatpush1.bf16.msra.mxu0 0
        %2650 = vmatprep.subr.bf16.mxu0 0
        %2651 = vmatpush1.bf16.msra.mxu0 0
        %2652 = vmatprep.subr.bf16.mxu0 0
        %2653 = vmatpush1.bf16.msra.mxu0 0
        %2654 = vmatprep.subr.bf16.mxu0 0
        %2655 = vmatpush1.bf16.msra.mxu0 0
        %2656 = vmatprep.subr.bf16.mxu0 0
        %2657 = vmatpush1.bf16.msra.mxu0 0
        %2658 = vmatprep.subr.bf16.mxu0 0
        %2659 = vmatpush1.bf16.msra.mxu0 0
        %2660 = vmatprep.subr.bf16.mxu0 0
        %2661 = vmatpush1.bf16.msra.mxu0 0
        %2662 = vmatprep.subr.bf16.mxu0 0
        %2663 = vmatpush1.bf16.msra.mxu0 0
        %2664 = vmatprep.mubr.bf16.mxu0 0
        %2665 = vmatmul.mubr.bf16.gmra.mrb[0].mxu0 %v2624
        %v2666 = vpop.f32.mrb[0].mxu0
        %v2667 = vadd.f32 %v2571, %v2666
        %v2668 = vpop.f32.mrb[0].mxu0
        %v2669 = vpop.f32.mrb[0].mxu0
        %v2670 = vadd.f32 %v2576, %v2669
        %v2671 = vpop.f32.mrb[0].mxu0
        %2672 = vmatprep.mubr.bf16.mxu0 0
        %2673 = vmatmul.mubr.bf16.gmra.mrb[0].mxu0 %v2625
        %v2674 = vpop.f32.mrb[0].mxu0
        %v2675 = vadd.f32 %v2581, %v2674
        %v2676 = vpop.f32.mrb[0].mxu0
        %v2677 = vpop.f32.mrb[0].mxu0
        %v2678 = vadd.f32 %v2586, %v2677
        %v2679 = vpop.f32.mrb[0].mxu0
        %2680 = vmatprep.mubr.bf16.mxu0 0
        %2681 = vmatmul.mubr.bf16.gmra.mrb[0].mxu0 %v2626
        %v2682 = vpop.f32.mrb[0].mxu0
        %v2683 = vadd.f32 %v2591, %v2682
        %v2684 = vpop.f32.mrb[0].mxu0
        %v2685 = vpop.f32.mrb[0].mxu0
        %v2686 = vadd.f32 %v2596, %v2685
        %v2687 = vpop.f32.mrb[0].mxu0
        %2688 = vmatprep.mubr.bf16.mxu0 0
        %2689 = vmatmul.mubr.bf16.gmra.mrb[0].mxu0 %v2627
        %v2690 = vpop.f32.mrb[0].mxu0
        %v2691 = vadd.f32 %v2601, %v2690
        %v2692 = vpop.f32.mrb[0].mxu0
        %v2693 = vpop.f32.mrb[0].mxu0
        %v2694 = vadd.f32 %v2606, %v2693
        %v2695 = vpop.f32.mrb[0].mxu0
        %2696 = vdwg.mxu0
        %v2697 = vmax.f32 %v2667, 0.0
        %v2698 = vmax.f32 %v2670, 0.0
        %v2699 = vmax.f32 %v2675, 0.0
        %v2700 = vmax.f32 %v2678, 0.0
        %v2701 = vmax.f32 %v2683, 0.0
        %v2702 = vmax.f32 %v2686, 0.0
        %v2703 = vmax.f32 %v2691, 0.0
        %v2704 = vmax.f32 %v2694, 0.0
        %v2705 = vpack.c.bf16 %v2698, %v2697
        %v2706 = vpack.c.bf16 %v2700, %v2699
        %v2707 = vpack.c.bf16 %v2702, %v2701
        %v2708 = vpack.c.bf16 %v2704, %v2703
        %v2709 = vld [vmem:[%s18] sm:$0xf]
        %v2710 = vld [vmem:[%s18 + $0x4] sm:$0xf]
        %v2711 = vld [vmem:[%s19] sm:$0xff]
        %v2712 = vld [vmem:[%s19 + $0x8] sm:$0xff]
        %2714 = vset.pattern.permute.xlu0 0
        %2715 = vperm.xlu0 %2714, %v2711
        %v2716 = vpop.permute.xlu0 %2715
        %2719 = vset.pattern.permute.xlu0 0
        %2720 = vperm.xlu0 %2719, %v2712
        %v2721 = vpop.permute.xlu0 %2720
        %v2725 = vunpack.c.l.b16 %v2709
        %v2726 = vunpack.c.l.b16 %v2710
        %v2727 = vpack.c.b16 %v2726, %v2725
        %v2729 = vsel %vm1198, %v2727, 0
        %2731 = vmatprep.subr.bf16.mxu0 0
        %2732 = vmatpush1.bf16.msra.mxu0 %v2705
        %2733 = vmatprep.subr.bf16.mxu0 0
        %2734 = vmatpush1.bf16.msra.mxu0 %v2706
        %2735 = vmatprep.subr.bf16.mxu0 0
        %2736 = vmatpush1.bf16.msra.mxu0 %v2707
        %2737 = vmatprep.subr.bf16.mxu0 0
        %2738 = vmatpush1.bf16.msra.mxu0 %v2708
        %2739 = vmatprep.subr.bf16.mxu0 0
        %2740 = vmatpush1.bf16.msra.mxu0 0
        %2741 = vmatprep.subr.bf16.mxu0 0
        %2742 = vmatpush1.bf16.msra.mxu0 0
        %2743 = vmatprep.subr.bf16.mxu0 0
        %2744 = vmatpush1.bf16.msra.mxu0 0
        %2745 = vmatprep.subr.bf16.mxu0 0
        %2746 = vmatpush1.bf16.msra.mxu0 0
        %2747 = vmatprep.subr.bf16.mxu0 0
        %2748 = vmatpush1.bf16.msra.mxu0 0
        %2749 = vmatprep.subr.bf16.mxu0 0
        %2750 = vmatpush1.bf16.msra.mxu0 0
        %2751 = vmatprep.subr.bf16.mxu0 0
        %2752 = vmatpush1.bf16.msra.mxu0 0
        %2753 = vmatprep.subr.bf16.mxu0 0
        %2754 = vmatpush1.bf16.msra.mxu0 0
        %2755 = vmatprep.subr.bf16.mxu0 0
        %2756 = vmatpush1.bf16.msra.mxu0 0
        %2757 = vmatprep.subr.bf16.mxu0 0
        %2758 = vmatpush1.bf16.msra.mxu0 0
        %2759 = vmatprep.subr.bf16.mxu0 0
        %2760 = vmatpush1.bf16.msra.mxu0 0
        %2761 = vmatprep.subr.bf16.mxu0 0
        %2762 = vmatpush1.bf16.msra.mxu0 0
        %2763 = vmatprep.mubr.bf16.mxu0 0
        %2764 = vmatmul.mubr.bf16.gmra.mrb[0].mxu0 %v2729
        %v2765 = vpop.f32.mrb[0].mxu0
        %v2766 = vadd.f32 %v2716, %v2765
        %v2767 = vpop.f32.mrb[0].mxu0
        %v2768 = vpop.f32.mrb[0].mxu0
        %v2769 = vadd.f32 %v2721, %v2768
        %v2770 = vpop.f32.mrb[0].mxu0
        %2771 = vdwg.mxu0
        %v2772 = vpack.c.bf16 %v2769, %v2766
        %v2774 = vunpack.c.l.b16 %v2772
        %v2775 = vunpack.c.h.b16 %v2772
        %v2776 = vpack.c.b16 %v2774, %v2774
        %v2777 = vpack.c.b16 %v2775, %v2775
        %2780 = vst [vmem:[%s672] sm:$0xf] %v2776
        %2781 = vst [vmem:[%s672 + $0x4] sm:$0xf] %v2777
        %2782 = vst [vmem:[%s697] sm:$0xff] %v1490
        %2783 = vst [vmem:[%s697 + $0x8] sm:$0xff] %v1491
        %2784 = vst [vmem:[%s697 + $0x10] sm:$0x3] %v1492
        %s2785 = sand.u32 %s485, 1
        %s2786 = scalar_lea.sflag [#allocation3], %s2785
        %s2787 = sand.u32 %s485, 1
        %s2788 = smul.addr %s2787, 8
        %s2789 = scalar_lea.vmem [#allocation2], %s2788
        %p2790 = scmp.lt.s32.totalorder %s40, 1
        %s2791 = scalar_select %p2790, %s40, 1
        %p2792 = scmp.lt.s32.totalorder %s41, 0
        %s2793 = scalar_select %p2792, %s41, 0
        %s2794 = smul.addr %s2791, 3
        %s2795 = sadd.s32 %s2793, %s2794
        %s2796 = smul.addr %s2795, 8
        %s2797 = scalar_lea.vmem %s21, %s2796
        // Predicated region
        $region101: #{tpu_custom_call.1} parent=99 // pred_check
          %p2798 = pneg %p495
        $region102: #{tpu_custom_call.1} parent=99 // pred_check_branch
          %2800 = sbr.rel (%p2798) target = $region104
        $region103: #{tpu_custom_call.1} parent=99 // pred_region
          %s2802 = ssub.s32 128, 128
          %2803 = vsyncadd %s2786, %s2802
          %s2804 = smul.addr %s40, 2
          %s2805 = sadd.s32 %s41, %s2804
          %s2806 = smul.addr %s2805, 64
          %s2807 = scalar_lea.hbm %s20, %s2806
          %s2808 = sshll.u32 %s2789, 4
          %s2809 = int_to_ptr.vmem [resolvable:$true] %s2808
          %2814 = dma.vmem_to_hbm [thread:$0]  %s2809, 128, %s2807, %s2786, 64, 64, 4
        $region104: #{tpu_custom_call.1} parent=99 // pred_fallthru
          _
        // Predicated region
        $region105: #{tpu_custom_call.1} parent=99 // pred_check
          %p2815 = pneg %p523
        $region106: #{tpu_custom_call.1} parent=99 // pred_check_branch
          %2817 = sbr.rel (%p2815) target = $region108
        $region107: #{tpu_custom_call.1} parent=99 // pred_region
          _
        $region108: #{tpu_custom_call.1} parent=99 // pred_fallthru
          _
      $region100: #{tpu_custom_call.1} parent=5 // pred_fallthru
        _
      %p2818 = scmp.le.s32.totalorder 2, %s31
      // Predicated region
      $region109: #{tpu_custom_call.1} parent=5 // pred_check
        %p2819 = pneg %p2818
      $region110: #{tpu_custom_call.1} parent=5 // pred_check_branch
        %2821 = sbr.rel (%p2819) target = $region112
      $region111: #{tpu_custom_call.1} parent=5 // pred_region
        %s2822 = ssub.s32 %s31, 2
        // Predicated region
        $region113: #{tpu_custom_call.1} parent=111 // pred_check
          %p2823 = pneg %p501
        $region114: #{tpu_custom_call.1} parent=111 // pred_check_branch
          %2825 = sbr.rel (%p2823) target = $region116
        $region115: #{tpu_custom_call.1} parent=111 // pred_region
          %s2826 = sand.u32 %s486, 1
          %s2827 = scalar_lea.sflag [#allocation3], %s2826
          %s2828 = sand.u32 %s486, 1
          %s2829 = smul.addr %s2828, 8
          %s2830 = scalar_lea.vmem [#allocation2], %s2829
          %2831 = dma.done %s2827, 128
        $region116: #{tpu_custom_call.1} parent=111 // pred_fallthru
          _
        // Predicated region
        $region117: #{tpu_custom_call.1} parent=111 // pred_check
          %p2832 = pneg %p529
        $region118: #{tpu_custom_call.1} parent=111 // pred_check_branch
          %2834 = sbr.rel (%p2832) target = $region120
        $region119: #{tpu_custom_call.1} parent=111 // pred_region
          %p2835 = scmp.lt.s32.totalorder %s42, 1
          %s2836 = scalar_select %p2835, %s42, 1
          %p2837 = scmp.lt.s32.totalorder %s43, 0
          %s2838 = scalar_select %p2837, %s43, 0
          %s2839 = smul.addr %s2836, 3
          %s2840 = sadd.s32 %s2838, %s2839
          %s2841 = smul.addr %s2840, 8
          %s2842 = scalar_lea.vmem %s21, %s2841
        $region120: #{tpu_custom_call.1} parent=111 // pred_fallthru
          _
      $region112: #{tpu_custom_call.1} parent=5 // pred_fallthru
        _
    $region6: #{tpu_custom_call.1} parent=1 // loop_footer
      %s35 = sadd.s32 1, %s31
    $region7: #{tpu_custom_call.1} parent=1 // loop_footer_branch
      %30 = sbr.rel target = $region3
    $region8: #{tpu_custom_call.1} parent=1 // loop_exit
      _
    %2843 = vsyncpa [#allocation3], 1
    %s2844 = scalar_lea.sflag [#allocation3], 1
    %2845 = vsyncpa %s2844, 1

</llo_original>
